<compile_context>
chip_gen: v7x
topology: tpu7x:2x2x1
jax: 0.10.0
libtpu: 0.0.40
codegen_flags: <defaults>
</compile_context>

<pallas_src>
import functools
import math

import jax
import jax.numpy as jnp
from jax.experimental import pallas as pl
from jax.experimental.pallas import tpu as pltpu


def _round_up(x, m):
    return ((x + m - 1) // m) * m


def _cdiv(a, b):
    return (a + b - 1) // b


# ----------------------------------------------------------------------------
# K-tiling policy, shared by weight preparation and the kernel wrapper so the
# prepared weights never need a per-call K pad.
# ----------------------------------------------------------------------------
_TK_FULL_MAX = 1536      # single full-K block up to this reduction size
_TK_SPLIT_MAX = 512      # K tile when the reduction is split over the grid


def _pick_kp(K):
    """Padded K the prepared weight gets, chosen so a legal TK divides it."""
    if K <= _TK_FULL_MAX:
        return K
    for cand in range(_TK_SPLIT_MAX, 127, -128):
        if K % cand == 0:
            return K
    return _round_up(K, 128)


def _pick_tk(Kp):
    if Kp <= _TK_FULL_MAX:
        return Kp
    for cand in range(_TK_SPLIT_MAX, 127, -128):
        if Kp % cand == 0:
            return cand
    return 128


@functools.lru_cache(maxsize=None)
def _tile_config():
    """(TM_MAX, TN_MAX, vmem_limit_bytes, generation) tuned per TPU generation."""
    gen = 0
    try:
        kind = jax.devices()[0].device_kind.lower()
        for g in (7, 6, 5, 4):
            if "v%d" % g in kind:
                gen = g
                break
    except Exception:
        gen = 0
    if gen == 6:
        # v6e: needs ~680 flops/byte to be compute bound -> 1024-wide tiles.
        return 1024, 1024, 96 * 1024 * 1024, gen
    if gen >= 7:
        # v7x: crossover ~311 flops/byte, but only 64 MiB VMEM per TensorCore.
        return 512, 512, 48 * 1024 * 1024, gen
    if gen == 5:
        return 512, 512, 64 * 1024 * 1024, gen
    return 512, 512, 48 * 1024 * 1024, gen


# ----------------------------------------------------------------------------
# Fused tiled Pallas kernel:
#   acc += A_tile(bf16) @ W_tile(bf16)                      (f32 accumulate, MXU)
#   out  = LeakyReLU?( acc + shift [+residual] )            (epilogue, VPU)
# BN scale is pre-folded into W and shift, so no scale stream is needed.
# ----------------------------------------------------------------------------
def _make_fused_kernel(multi_k: bool, has_residual: bool, lrelu: bool):
    if multi_k:
        def kernel(a_ref, w_ref, shift_ref, *rest):
            if has_residual:
                res_ref, o_ref, acc_ref = rest
            else:
                o_ref, acc_ref = rest
                res_ref = None
            k = pl.program_id(2)

            @pl.when(k == 0)
            def _init():
                acc_ref[...] = jnp.zeros_like(acc_ref)

            acc_ref[...] += jnp.dot(a_ref[...], w_ref[...],
                                    preferred_element_type=jnp.float32)

            @pl.when(k == pl.num_programs(2) - 1)
            def _finalize():
                y = acc_ref[...] + shift_ref[...]
                if has_residual:
                    y = y + res_ref[...].astype(jnp.float32)
                if lrelu:
                    y = jnp.where(y >= 0.0, y, 0.01 * y)   # LeakyReLU default slope
                o_ref[...] = y.astype(o_ref.dtype)
    else:
        # Single-K-block specialization: no VMEM accumulator round trip.
        def kernel(a_ref, w_ref, shift_ref, *rest):
            if has_residual:
                res_ref, o_ref = rest
            else:
                (o_ref,) = rest
                res_ref = None
            y = jnp.dot(a_ref[...], w_ref[...], preferred_element_type=jnp.float32)
            y = y + shift_ref[...]
            if has_residual:
                y = y + res_ref[...].astype(jnp.float32)
            if lrelu:
                y = jnp.where(y >= 0.0, y, 0.01 * y)
            o_ref[...] = y.astype(o_ref.dtype)
    return kernel


def pallas_fused_matmul(a, w, shift, n_out, residual=None, lrelu=False,
                        out_dtype=jnp.bfloat16):
    """y = LeakyReLU?((a @ w) + shift + residual), sliced to n_out channels.

    a: (M, Kp) bf16-ish, w: (Kp, Np) bf16 pre-padded (BN scale folded in),
    shift: (1, Np) f32 (conv bias folded into BN shift).  residual: (M, n_out).
    Np is a 128 multiple; Kp has a legal TK divisor (guaranteed by _pick_kp).
    """
    M, Kp = a.shape
    Kw, Np = w.shape
    assert Kp == Kw, (Kp, Kw)

    a = a.astype(jnp.bfloat16)
    w = w.astype(jnp.bfloat16)
    shift = shift.astype(jnp.float32)

    # --- degenerate GEMMs (tiny M or K): launch/padding overhead dominates ----
    if M < 64 or Kp < 16:
        y = jnp.dot(a, w, preferred_element_type=jnp.float32) + shift
        y = y[:, :n_out]
        if residual is not None:
            y = y + residual.astype(jnp.float32)
        if lrelu:
            y = jnp.where(y >= 0.0, y, 0.01 * y)
        return y.astype(out_dtype)

    TM_MAX, TN_MAX, vmem_limit, gen = _tile_config()

    # --- K tiling (TK always divides Kp -> no masked reduction tail) ----------
    TK = _pick_tk(Kp)
    gk = Kp // TK

    # --- N tiling: largest 128-multiple divisor of Np (lane-dense stores) -----
    TN = 128
    for cand in range(min(TN_MAX, Np), 127, -128):
        if Np % cand == 0:
            TN = cand
            break

    # --- M tiling: ragged last block handled by Pallas masking ----------------
    TM = min(TM_MAX, _round_up(M, 8))

    gm, gn = _cdiv(M, TM), Np // TN

    # --- v7x dual-TensorCore guard: keep both cores busy on the parallel axes -
    if gen >= 7 and gm == 1 and gn == 1:
        if M >= 256:
            TM = _round_up(_cdiv(M, 2), 8)
            gm = _cdiv(M, TM)
        elif Np >= 256:
            for cand in range(((Np // 2) // 128) * 128, 127, -128):
                if Np % cand == 0:
                    TN = cand
                    break
            gn = Np // TN

    has_res = residual is not None
    res_p = None
    if has_res:
        res_p = residual.astype(jnp.bfloat16)
        if Np > n_out:
            res_p = jnp.pad(res_p, ((0, 0), (0, Np - n_out)))

    multi_k = gk > 1

    in_specs = [
        pl.BlockSpec((TM, TK), lambda m, n, k: (m, k)),
        pl.BlockSpec((TK, TN), lambda m, n, k: (k, n)),
        pl.BlockSpec((1, TN), lambda m, n, k: (0, n)),
    ]
    args = [a, w, shift]
    if has_res:
        in_specs.append(pl.BlockSpec((TM, TN), lambda m, n, k: (m, n)))
        args.append(res_p)

    scratch = [pltpu.VMEM((TM, TN), jnp.float32)] if multi_k else []

    # A is streamed gn times, W gm times; residual + output once each.
    cost = pl.CostEstimate(
        flops=int(2 * M * Kp * Np),
        transcendentals=0,
        bytes_accessed=int(2 * M * Kp * gn + 2 * Kp * Np * gm
                           + 2 * M * Np * (2 if has_res else 1) + 4 * Np),
    )

    out = pl.pallas_call(
        _make_fused_kernel(multi_k, has_res, lrelu),
        out_shape=jax.ShapeDtypeStruct((M, Np), out_dtype),
        grid=(gm, gn, gk),
        in_specs=in_specs,
        out_specs=pl.BlockSpec((TM, TN), lambda m, n, k: (m, n)),
        scratch_shapes=scratch,
        compiler_params=pltpu.CompilerParams(
            dimension_semantics=("parallel", "parallel", "arbitrary"),
            vmem_limit_bytes=vmem_limit),
        cost_estimate=cost,
    )(*args)

    if Np > n_out:
        out = out[:, :n_out]
    return out


# ----------------------------------------------------------------------------
# Prepared conv parameters (weights folded/padded ONCE, outside jit).
# Static channel count `n` rides along as pytree aux_data so it stays a Python
# int under jit.
# ----------------------------------------------------------------------------
@jax.tree_util.register_pytree_node_class
class ConvParams:
    def __init__(self, w, shift, n):
        self.w = w          # (Kp, Np) bf16, BN scale folded in
        self.shift = shift  # (1, Np) f32, conv bias folded into BN shift
        self.n = n          # true output channel count (static)

    def tree_flatten(self):
        return (self.w, self.shift), self.n

    @classmethod
    def tree_unflatten(cls, aux, children):
        return cls(children[0], children[1], aux)


def _prep_conv(w, b, bn_scale=None, bn_shift=None):
    """Fold BN into (w, b), reshape to (K, Cout), cast bf16, pad K->Kp, N->Np."""
    if w.ndim == 4:
        kh, kw, cin, cout = w.shape
        wm = w.reshape(kh * kw * cin, cout)
    else:
        wm = w
        cout = w.shape[-1]
    wm = wm.astype(jnp.float32)
    sh = b.astype(jnp.float32)
    if bn_scale is not None:
        wm = wm * bn_scale[None, :]
        sh = sh * bn_scale + bn_shift
    K = wm.shape[0]
    Kp = _pick_kp(K)
    Np = _round_up(cout, 128)
    wm = jnp.pad(wm, ((0, Kp - K), (0, Np - cout))).astype(jnp.bfloat16)
    sh = jnp.pad(sh, (0, Np - cout)).reshape(1, Np)
    return ConvParams(wm, sh, int(cout))


# ----------------------------------------------------------------------------
# Conv wrappers (im2col glue in JAX, fused tiled matmul in Pallas)
# ----------------------------------------------------------------------------
def _extract_patches_3x3(x, dilation, k_out):
    """x: (N,H,W,C) -> (N,H,W,k_out); 'same' padding = dilation.
    k_out >= 9*C; the (tiny) zero tail is appended here instead of a separate
    full-tensor jnp.pad pass over the im2col matrix."""
    N, H, W, C = x.shape
    p = dilation
    xp = jnp.pad(x, ((0, 0), (p, p), (p, p), (0, 0)))
    cols = [xp[:, dy * p:dy * p + H, dx * p:dx * p + W, :]
            for dy in range(3) for dx in range(3)]
    if k_out > 9 * C:
        cols.append(jnp.zeros((N, H, W, k_out - 9 * C), x.dtype))
    return jnp.concatenate(cols, axis=-1)


def conv3x3(x, cp, dilation, residual=None, lrelu=False):
    """x: (N,H,W,Cin), cp: ConvParams for a 3x3 conv (+ optional folded BN)."""
    x = x.astype(jnp.bfloat16)
    N, H, W, C = x.shape
    kp = cp.w.shape[0]
    a = _extract_patches_3x3(x, dilation, kp).reshape(N * H * W, kp)
    res = None if residual is None else residual.reshape(N * H * W, -1)
    out = pallas_fused_matmul(a, cp.w, cp.shift, cp.n, residual=res, lrelu=lrelu)
    return out.reshape(N, H, W, cp.n)


def conv1x1(x, cp, lrelu=False):
    x = x.astype(jnp.bfloat16)
    N, H, W, C = x.shape
    kp = cp.w.shape[0]
    a = x.reshape(N * H * W, C)
    if kp > C:
        a = jnp.pad(a, ((0, 0), (0, kp - C)))
    out = pallas_fused_matmul(a, cp.w, cp.shift, cp.n, lrelu=lrelu)
    return out.reshape(N, H, W, cp.n)


# ----------------------------------------------------------------------------
# Plain-JAX glue: bilinear interpolate (align_corners=True) and grid_sample
# ----------------------------------------------------------------------------
def bilinear_resize_align_corners(x, out_h, out_w):
    N, H, W, C = x.shape
    if out_h == H and out_w == W:
        return x
    ys = (jnp.arange(out_h, dtype=jnp.float32) * ((H - 1) / (out_h - 1))
          if out_h > 1 else jnp.zeros((out_h,), jnp.float32))
    xs = (jnp.arange(out_w, dtype=jnp.float32) * ((W - 1) / (out_w - 1))
          if out_w > 1 else jnp.zeros((out_w,), jnp.float32))
    y0 = jnp.clip(jnp.floor(ys).astype(jnp.int32), 0, H - 1)
    y1 = jnp.clip(y0 + 1, 0, H - 1)
    wy = (ys - y0.astype(jnp.float32))[None, :, None, None]
    x0 = jnp.clip(jnp.floor(xs).astype(jnp.int32), 0, W - 1)
    x1 = jnp.clip(x0 + 1, 0, W - 1)
    wx = (xs - x0.astype(jnp.float32))[None, None, :, None]

    r0 = x[:, y0]
    r1 = x[:, y1]
    top = r0[:, :, x0] * (1.0 - wx) + r0[:, :, x1] * wx
    bot = r1[:, :, x0] * (1.0 - wx) + r1[:, :, x1] * wx
    return top * (1.0 - wy) + bot * wy


def grid_sample_bilinear_zeros(x, gx, gy):
    """F.grid_sample(mode='bilinear', align_corners=False, padding_mode='zeros').
    x: (1,H,W,C), gx/gy: (P,) normalized coords in [-1,1]. Returns (P, C) f32."""
    _, H, W, C = x.shape
    xf = x.astype(jnp.float32)
    ix = ((gx + 1.0) * W - 1.0) / 2.0
    iy = ((gy + 1.0) * H - 1.0) / 2.0
    x0 = jnp.floor(ix).astype(jnp.int32)
    y0 = jnp.floor(iy).astype(jnp.int32)
    x1, y1 = x0 + 1, y0 + 1
    wx1 = ix - x0.astype(jnp.float32)
    wy1 = iy - y0.astype(jnp.float32)
    wx0, wy0 = 1.0 - wx1, 1.0 - wy1

    def g(yy, xx):
        valid = (yy >= 0) & (yy < H) & (xx >= 0) & (xx < W)
        yyc = jnp.clip(yy, 0, H - 1)
        xxc = jnp.clip(xx, 0, W - 1)
        v = xf[0, yyc, xxc, :]
        return jnp.where(valid[:, None], v, 0.0)

    return (g(y0, x0) * (wy0 * wx0)[:, None] + g(y0, x1) * (wy0 * wx1)[:, None]
            + g(y1, x0) * (wy1 * wx0)[:, None] + g(y1, x1) * (wy1 * wx1)[:, None])


def get_sphere_feature(x, pix, pix_sphere, scale, out_img_W, out_img_H):
    """x: (1,H,W,C) NHWC. Returns (1, out_H/scale, out_W/scale, C) NHWC, bf16."""
    out_W = round(out_img_W / scale)
    out_H = round(out_img_H / scale)
    _, H, W, C = x.shape

    map_sphere = jnp.full((out_W, out_H, 2), -10.0, jnp.float32)
    pss = jnp.round(pix_sphere / scale).astype(jnp.int32)
    pix_scale = (pix // scale).astype(jnp.float32)
    pss0 = jnp.clip(pss[:, 0], 0, out_W - 1)
    pss1 = jnp.clip(pss[:, 1], 0, out_H - 1)
    map_sphere = map_sphere.at[pss0, pss1, :].set(pix_scale)

    ms = map_sphere.reshape(-1, 2)
    gx = ms[:, 0] / W * 2.0 - 1.0
    gy = ms[:, 1] / H * 2.0 - 1.0

    feats = grid_sample_bilinear_zeros(x, gx, gy)          # (out_W*out_H, C)
    feats = feats.reshape(out_W, out_H, C)
    feats = jnp.transpose(feats, (1, 0, 2))[None]          # (1, out_H, out_W, C)
    return feats.astype(jnp.bfloat16)


# ----------------------------------------------------------------------------
# Module blocks
# ----------------------------------------------------------------------------
def basic_block(x, p, dilations):
    residual = x
    x = conv3x3(x, p["c1"], dilations[0], lrelu=True)                    # conv+BN+LReLU
    x = conv3x3(x, p["c2"], dilations[1], residual=residual, lrelu=True)  # conv+BN+res+LReLU
    return x


def upsample_bn(x, concat_with, p):
    out_h, out_w = concat_with.shape[1], concat_with.shape[2]
    up_x = bilinear_resize_align_corners(x, out_h, out_w)
    f = jnp.concatenate([up_x.astype(jnp.bfloat16),
                         concat_with.astype(jnp.bfloat16)], axis=-1)
    y = conv3x3(f, p["c0"], 1)                                           # plain conv
    y = basic_block(y, p["bb1"], (1, 1))
    y = basic_block(y, p["bb2"], (2, 2))
    y = basic_block(y, p["bb3"], (3, 3))
    return y


def encoder_features(x, ep):
    """Synthetic deterministic feature pyramid standing in for EfficientNet-B7."""
    feats = [None] * 12
    feats[0] = x

    def ds(z, f):
        N, H, W, C = z.shape
        return z.reshape(N, H // f, f, W // f, f, C).mean(axis=(2, 4))

    feats[4] = conv1x1(ds(x, 2), ep["2"], lrelu=True)     # 32 ch, /2
    feats[5] = conv1x1(ds(x, 4), ep["4"], lrelu=True)     # 48 ch, /4
    feats[6] = conv1x1(ds(x, 8), ep["8"], lrelu=True)     # 80 ch, /8
    feats[8] = conv1x1(ds(x, 16), ep["16"], lrelu=True)   # 224 ch, /16
    feats[11] = conv1x1(ds(x, 32), ep["32"], lrelu=True)  # num_features, /32
    return feats


def unet2d_sphere_forward(params, x_nchw, pix, pix_sphere, out_img_H, out_img_W):
    x = jnp.transpose(x_nchw, (0, 2, 3, 1))  # NCHW -> NHWC

    feats = encoder_features(x, params["enc"])
    xb1, xb2, xb4, xb8, xb16, xb32 = (feats[0], feats[4], feats[5], feats[6],
                                      feats[8], feats[11])

    # conv2: Conv2d(bottleneck, features, kernel_size=1, padding=1)
    xb32p = jnp.pad(xb32, ((0, 0), (1, 1), (1, 1), (0, 0)))
    xb32c = conv1x1(xb32p, params["conv2"])

    xs32 = get_sphere_feature(xb32c, pix, pix_sphere, 32, out_img_W, out_img_H)
    xs16 = get_sphere_feature(xb16, pix, pix_sphere, 16, out_img_W, out_img_H)
    xs8 = get_sphere_feature(xb8, pix, pix_sphere, 8, out_img_W, out_img_H)
    xs4 = get_sphere_feature(xb4, pix, pix_sphere, 4, out_img_W, out_img_H)
    xs2 = get_sphere_feature(xb2, pix, pix_sphere, 2, out_img_W, out_img_H)
    xs1 = get_sphere_feature(xb1, pix, pix_sphere, 1, out_img_W, out_img_H)

    x_1_16 = upsample_bn(xs32, xs16, params["up16"])
    x_1_8 = upsample_bn(x_1_16, xs8, params["up8"])
    x_1_4 = upsample_bn(x_1_8, xs4, params["up4"])
    x_1_2 = upsample_bn(x_1_4, xs2, params["up2"])
    x_1_1 = upsample_bn(x_1_2, xs1, params["up1"])

    def to_nchw(t):
        return jnp.transpose(t, (0, 3, 1, 2)).astype(jnp.float32)

    return {"1_1": to_nchw(x_1_1), "1_2": to_nchw(x_1_2), "1_4": to_nchw(x_1_4),
            "1_8": to_nchw(x_1_8), "1_16": to_nchw(x_1_16)}


# ----------------------------------------------------------------------------
# Deterministic parameter initialization (torch-like raw params) + preparation
# ----------------------------------------------------------------------------
def _init_conv(key, kh, kw, cin, cout):
    wk, bk = jax.random.split(key)
    w = jax.random.normal(wk, (kh, kw, cin, cout), jnp.float32) / math.sqrt(kh * kw * cin)
    b = 0.01 * jax.random.normal(bk, (cout,), jnp.float32)
    return w, b


def _init_bn_folded(c, eps=1e-5):
    # BatchNorm2d inference mode, default init: gamma=1, beta=0, mean=0, var=1
    scale = jnp.full((c,), 1.0 / math.sqrt(1.0 + eps), jnp.float32)
    shift = jnp.zeros((c,), jnp.float32)
    return scale, shift


def _init_basic_block(key, c):
    k1, k2 = jax.random.split(key)
    w1, b1 = _init_conv(k1, 3, 3, c, c)
    w2, b2 = _init_conv(k2, 3, 3, c, c)
    s1, t1 = _init_bn_folded(c)
    s2, t2 = _init_bn_folded(c)
    return {"w1": w1, "b1": b1, "s1": s1, "t1": t1,
            "w2": w2, "b2": b2, "s2": s2, "t2": t2}


def _init_upsample(key, cin, cout):
    k0, k1, k2, k3 = jax.random.split(key, 4)
    w0, b0 = _init_conv(k0, 3, 3, cin, cout)
    return {"w0": w0, "b0": b0,
            "bb1": _init_basic_block(k1, cout),
            "bb2": _init_basic_block(k2, cout),
            "bb3": _init_basic_block(k3, cout)}


def init_params(key, num_features):
    feats = num_features
    f16, f8, f4, f2, f1 = feats // 2, feats // 4, feats // 8, feats // 16, feats // 32
    keys = jax.random.split(key, 16)

    enc = {}
    enc["w2"], enc["b2"] = _init_conv(keys[0], 1, 1, 3, 32)
    enc["w4"], enc["b4"] = _init_conv(keys[1], 1, 1, 3, 48)
    enc["w8"], enc["b8"] = _init_conv(keys[2], 1, 1, 3, 80)
    enc["w16"], enc["b16"] = _init_conv(keys[3], 1, 1, 3, 224)
    enc["w32"], enc["b32"] = _init_conv(keys[4], 1, 1, 3, feats)

    conv2_w, conv2_b = _init_conv(keys[5], 1, 1, feats, feats)

    params = {
        "enc": enc,
        "conv2_w": conv2_w, "conv2_b": conv2_b,
        "up16": _init_upsample(keys[6], feats + 224, f16),
        "up8": _init_upsample(keys[7], f16 + 80, f8),
        "up4": _init_upsample(keys[8], f8 + 48, f4),
        "up2": _init_upsample(keys[9], f4 + 32, f2),
        "up1": _init_upsample(keys[10], f2 + 3, f1),
    }
    # NOTE: resize_* / resize_output_* convs exist in __init__ but are unused in forward.
    return params


def prepare_params(raw):
    """Fold BN into weights, cast bf16, reshape and K/N-pad -- once, outside jit."""
    def bb(p):
        return {"c1": _prep_conv(p["w1"], p["b1"], p["s1"], p["t1"]),
                "c2": _prep_conv(p["w2"], p["b2"], p["s2"], p["t2"])}

    def up(p):
        return {"c0": _prep_conv(p["w0"], p["b0"]),
                "bb1": bb(p["bb1"]), "bb2": bb(p["bb2"]), "bb3": bb(p["bb3"])}

    enc = raw["enc"]
    return {
        "enc": {s: _prep_conv(enc["w" + s], enc["b" + s])
                for s in ("2", "4", "8", "16", "32")},
        "conv2": _prep_conv(raw["conv2_w"], raw["conv2_b"]),
        "up16": up(raw["up16"]), "up8": up(raw["up8"]), "up4": up(raw["up4"]),
        "up2": up(raw["up2"]), "up1": up(raw["up1"]),
    }


# ----------------------------------------------------------------------------
if __name__ == "__main__":
    # ---- quick correctness self-check of the fused GEMM (split-K path) ------
    ka, kb = jax.random.split(jax.random.PRNGKey(1))
    A = jax.random.normal(ka, (256, 2048), jnp.float32).astype(jnp.bfloat16)
    Wt = (jax.random.normal(kb, (2048, 256), jnp.float32) / 45.0).astype(jnp.bfloat16)
    sh = jnp.zeros((1, 256), jnp.float32)
    y = pallas_fused_matmul(A, Wt, sh, 256, lrelu=True).astype(jnp.float32)
    ref = jnp.dot(A.astype(jnp.float32), Wt.astype(jnp.float32))
    ref = jnp.where(ref >= 0.0, ref, 0.01 * ref)
    assert y.shape == (256, 256)
    assert float(jnp.max(jnp.abs(y - ref))) < 0.25, "fused GEMM mismatch"

    # ---- end-to-end UNet2DSphere forward -------------------------------------
    N, Cin, H_in, W_in = 1, 3, 64, 64
    out_img_H, out_img_W = 32, 32
    num_features = 256            # small synthetic config (build() uses 2560)
    P = 200

    key = jax.random.PRNGKey(0)
    k_x, k_pix, k_sph, k_par = jax.random.split(key, 4)

    x = jax.random.normal(k_x, (N, Cin, H_in, W_in), jnp.float32)
    kpx, kpy = jax.random.split(k_pix)
    pix = jnp.stack([jax.random.randint(kpx, (P,), 0, W_in),
                     jax.random.randint(kpy, (P,), 0, H_in)], axis=1).astype(jnp.int32)
    ksx, ksy = jax.random.split(k_sph)
    pix_sphere = jnp.stack(
        [jax.random.uniform(ksx, (P,), minval=0.0, maxval=float(out_img_W - 1)),
         jax.random.uniform(ksy, (P,), minval=0.0, maxval=float(out_img_H - 1))], axis=1)

    raw_params = init_params(k_par, num_features)
    params = prepare_params(raw_params)   # bf16 / BN-folded / padded, done ONCE

    fwd = jax.jit(functools.partial(unet2d_sphere_forward,
                                    out_img_H=out_img_H, out_img_W=out_img_W))
    out = fwd(params, x, pix, pix_sphere)
    out = jax.block_until_ready(out)

    expected = {"1_1": (1, num_features // 32, 32, 32),
                "1_2": (1, num_features // 16, 16, 16),
                "1_4": (1, num_features // 8, 8, 8),
                "1_8": (1, num_features // 4, 4, 4),
                "1_16": (1, num_features // 2, 2, 2)}
    for k, shp in expected.items():
        assert out[k].shape == shp, (k, out[k].shape, shp)
        assert bool(jnp.all(jnp.isfinite(out[k])))

    print("KERNEL_OK")
</pallas_src>

<mosaic_0001>
module attributes {stable_mosaic.version = 11 : i64} {
  func.func @kernel(%arg0: i32, %arg1: i32, %arg2: i32, %arg3: memref<256x512xbf16, #tpu.memory_space<vmem>>, %arg4: memref<512x256xbf16, #tpu.memory_space<vmem>>, %arg5: memref<1x256xf32, #tpu.memory_space<vmem>>, %arg6: memref<256x256xbf16, #tpu.memory_space<vmem>>, %arg7: memref<256x256xf32, #tpu.memory_space<vmem>>) attributes {dimension_semantics = [#tpu.dimension_semantics<parallel>, #tpu.dimension_semantics<parallel>, #tpu.dimension_semantics<arbitrary>], iteration_bounds = array<i64: 1, 1, 4>, scalar_prefetch = 0 : i64, scratch_operands = 1 : i64, tpu.core_type = #tpu.core_type<tc>, window_params = [{transform_indices = @transform_0, window_bounds = array<i64: 256, 512>}, {transform_indices = @transform_1, window_bounds = array<i64: 512, 256>}, {transform_indices = @transform_2, window_bounds = array<i64: 1, 256>}, {transform_indices = @transform_3, window_bounds = array<i64: 256, 256>}]} {
    %c0_i32 = arith.constant 0 : i32
    %0 = arith.cmpi eq, %arg2, %c0_i32 : i32
    %1 = arith.extui %0 : i1 to i32
    %c0_i32_0 = arith.constant 0 : i32
    %2 = arith.cmpi ne, %1, %c0_i32_0 : i32
    scf.if %2 {
      %cst_9 = arith.constant 0.000000e+00 : f32
      %12 = vector.broadcast %cst_9 : f32 to vector<256x256xf32>
      %c0_10 = arith.constant 0 : index
      %c0_11 = arith.constant 0 : index
      %13 = vector.load %arg7[%c0_10, %c0_11] : memref<256x256xf32, #tpu.memory_space<vmem>>, vector<256x256xf32>
      tpu.vector_store %arg7[%c0_10, %c0_11], %12 {strides = array<i32>} : memref<256x256xf32, #tpu.memory_space<vmem>>, vector<256x256xf32>,
    } else {
    }
    %c0 = arith.constant 0 : index
    %c0_1 = arith.constant 0 : index
    %3 = vector.load %arg7[%c0, %c0_1] : memref<256x256xf32, #tpu.memory_space<vmem>>, vector<256x256xf32>
    %c0_2 = arith.constant 0 : index
    %c0_3 = arith.constant 0 : index
    %4 = vector.load %arg3[%c0_2, %c0_3] : memref<256x512xbf16, #tpu.memory_space<vmem>>, vector<256x512xbf16>
    %c0_4 = arith.constant 0 : index
    %c0_5 = arith.constant 0 : index
    %5 = vector.load %arg4[%c0_4, %c0_5] : memref<512x256xbf16, #tpu.memory_space<vmem>>, vector<512x256xbf16>
    %cst = arith.constant dense<0.000000e+00> : vector<256x256xf32>
    %6 = tpu.matmul %4, %5, %cst {dimension_numbers = #tpu.dot_dimension_numbers<[1], [0], [0], [1], [0, 0, 1, 1], [], []>} : vector<256x512xbf16>, vector<512x256xbf16>, vector<256x256xf32> -> vector<256x256xf32>
    %7 = arith.addf %3, %6 : vector<256x256xf32>
    %c0_6 = arith.constant 0 : index
    %c0_7 = arith.constant 0 : index
    %8 = vector.load %arg7[%c0_6, %c0_7] : memref<256x256xf32, #tpu.memory_space<vmem>>, vector<256x256xf32>
    tpu.vector_store %arg7[%c0_6, %c0_7], %7 {strides = array<i32>} : memref<256x256xf32, #tpu.memory_space<vmem>>, vector<256x256xf32>,
    %c3_i32 = arith.constant 3 : i32
    %9 = arith.cmpi eq, %arg2, %c3_i32 : i32
    %10 = arith.extui %9 : i1 to i32
    %c0_i32_8 = arith.constant 0 : i32
    %11 = arith.cmpi ne, %10, %c0_i32_8 : i32
    scf.if %11 {
      %c0_9 = arith.constant 0 : index
      %c0_10 = arith.constant 0 : index
      %12 = vector.load %arg7[%c0_9, %c0_10] : memref<256x256xf32, #tpu.memory_space<vmem>>, vector<256x256xf32>
      %c0_11 = arith.constant 0 : index
      %c0_12 = arith.constant 0 : index
      %13 = vector.load %arg5[%c0_11, %c0_12] : memref<1x256xf32, #tpu.memory_space<vmem>>, vector<1x256xf32>
      %14 = vector.broadcast %13 : vector<1x256xf32> to vector<256x256xf32>
      %15 = arith.addf %12, %14 : vector<256x256xf32>
      %cst_13 = arith.constant 0.000000e+00 : f32
      %16 = vector.broadcast %cst_13 : f32 to vector<256x256xf32>
      %17 = arith.cmpf oge, %15, %16 : vector<256x256xf32>
      %cst_14 = arith.constant 0.00999999977 : f32
      %18 = vector.broadcast %cst_14 : f32 to vector<256x256xf32>
      %19 = arith.mulf %18, %15 : vector<256x256xf32>
      %20 = arith.select %17, %15, %19 : vector<256x256xi1>, vector<256x256xf32>
      %21 = arith.truncf %20 : vector<256x256xf32> to vector<256x256xbf16>
      %c0_15 = arith.constant 0 : index
      %c0_16 = arith.constant 0 : index
      %22 = vector.load %arg6[%c0_15, %c0_16] : memref<256x256xbf16, #tpu.memory_space<vmem>>, vector<256x256xbf16>
      tpu.vector_store %arg6[%c0_15, %c0_16], %21 {strides = array<i32>} : memref<256x256xbf16, #tpu.memory_space<vmem>>, vector<256x256xbf16>,
    } else {
    }
    return
  }
  func.func @transform_0(%arg0: i32, %arg1: i32, %arg2: i32) -> (i32, i32) {
    %c0_i32 = arith.constant 0 : i32
    return %arg0, %arg2 : i32, i32
  }
  func.func @transform_1(%arg0: i32, %arg1: i32, %arg2: i32) -> (i32, i32) {
    %c0_i32 = arith.constant 0 : i32
    return %arg2, %arg1 : i32, i32
  }
  func.func @transform_2(%arg0: i32, %arg1: i32, %arg2: i32) -> (i32, i32) {
    %c0_i32 = arith.constant 0 : i32
    %c0_i32_0 = arith.constant 0 : i32
    return %c0_i32, %arg1 : i32, i32
  }
  func.func @transform_3(%arg0: i32, %arg1: i32, %arg2: i32) -> (i32, i32) {
    %c0_i32 = arith.constant 0 : i32
    return %arg0, %arg1 : i32, i32
  }
}

</mosaic_0001>

<llo_original>
// kernel: tpu_custom_call.1
$region0: #{tpu_custom_call.1}
  #allocation0 [shape = 'u32[]', space=smem, size = 0x4, offset = 0x4, fixed_abs, tag = 'smem constant byte address 0x4 - core index']
  #allocation1 [shape = 'u32[144,128]{1,0:T(1,128)}', space=vmem, size = 0x12000, scoped, tag = 'internal scratch']
  #allocation2 [shape = 'f32[256,256]{1,0:T(8,128)}', space=vmem, size = 0x40000, scoped, tag = 'scratch operand']
  %s0 = inlined_call_operand.hbm [shape: bf16[256,2048], index: 0, kind: input, shape index: {}]
  %s1 = inlined_call_operand.hbm [shape: bf16[2048,256], index: 1, kind: input, shape index: {}]
  %s2 = inlined_call_operand.vmem [shape: f32[1,256], index: 2, kind: input, shape index: {}]
  %s3 = inlined_call_operand.hbm [shape: bf16[256,256], index: 3, kind: output, shape index: {}]
  %s4 = sld [smem:[#allocation0]]
  $region61: #{tpu_custom_call.1} parent=0
    _
  %s6 = ssub.s32 1, %s4
  %s7 = scalar_select 0, %s6, %s4
  $region1: #{tpu_custom_call.1} parent=0
    #allocation3 [shape = 'u8[524288]{0}', space=vmem, size = 0x80000, scoped, tag = 'input window, operand 0']
    #allocation4 [shape = 's32[2]{0}', space=sflag, size = 0x8, scoped, tag = 'scoped memory for tpu_custom_call.1']
    #allocation5 [shape = 's32[2]{0}', space=sflag, size = 0x8, scoped, tag = 'scoped memory for tpu_custom_call.1']
    #allocation6 [shape = 'u8[524288]{0}', space=vmem, size = 0x80000, scoped, tag = 'input window, operand 1']
    #allocation7 [shape = 's32[2]{0}', space=sflag, size = 0x8, scoped, tag = 'scoped memory for tpu_custom_call.1']
    #allocation8 [shape = 'u8[131072]{0}', space=vmem, size = 0x20000, scoped, tag = 'output window, operand 0, single buffered']
    %8 = vsyncpa [#allocation4], 0
    %s9 = scalar_lea.sflag [#allocation4], 1
    %10 = vsyncpa %s9, 0
    %11 = vsyncpa [#allocation7], 0
    %s12 = scalar_lea.sflag [#allocation7], 1
    %13 = vsyncpa %s12, 0
    %14 = vsyncpa [#allocation5], 0
    loop: start=0, step=1, limit=6
    $region2: #{tpu_custom_call.1} parent=1 // loop_pre_header
      _
    $region3: #{tpu_custom_call.1} parent=1 // loop_header
      %s16 = sphi 0, %s20
      %p17 = scmp.ge.s32.totalorder %s16, 6
      %s23 = sphi 0, %s42
      %s24 = sphi 0, %s38
      %s25 = sphi 0, %s34
      %s26 = sphi 0, %s23
      %s27 = sphi 0, %s24
      %s28 = sphi 0, %s25
      %s29 = sphi 0, %s26
      %s30 = sphi 0, %s27
      %s31 = sphi 0, %s28
      %s47 = sphi 0, %s49
      %s50 = sphi 0, %s47
      %s51 = sphi 0, %s50
      %s67 = sphi 0, %s51
      %s75 = sphi 0, %s77
      %s78 = sphi 0, %s75
      %s79 = sphi 0, %s78
      %s95 = sphi 0, %s79
      %s101 = sphi 0, %s103
      %s104 = sphi 0, %s101
      %s105 = sphi 0, %s104
      %s121 = sphi 0, %s105
      %s129 = sphi 0, %s131
      %s132 = sphi 0, %s129
      %s133 = sphi 0, %s132
      %s149 = sphi 0, %s133
    $region4: #{tpu_custom_call.1} parent=1 // loop_header_branch
      %19 = sbr.rel (%p17) target = $region8
    $region5: #{tpu_custom_call.1} parent=1 // loop_body
      %s21 = ssub.s32 %s16, 1
      %s22 = ssub.s32 %s16, 2
      %s32 = sadd.s32 1, %s25
      %p33 = scmp.ge.s32.totalorder %s32, 4
      %s34 = scalar_select %p33, 0, %s32
      %s35 = sadd.s32 1, %s24
      %s36 = scalar_select %p33, %s35, %s24
      %p37 = scmp.ge.s32.totalorder %s36, 1
      %s38 = scalar_select %p37, 0, %s36
      %s39 = sadd.s32 1, %s23
      %s40 = scalar_select %p37, %s39, %s23
      %p41 = scmp.ge.s32.totalorder %s40, 1
      %s42 = scalar_select %p41, 0, %s40
      %s43 = ssub.s32 %s23, %s42
      %s44 = ssub.s32 %s25, %s34
      %s45 = sor.u32 %s43, %s44
      %p46 = scmp.eq.s32.totalorder %s45, 0
      %s48 = sadd.s32 %s47, 1
      %s49 = scalar_select %p46, %s47, %s48
      %p52 = pneg %p46
      %p53 = scmp.eq.s32.totalorder %s16, 3
      %p54 = por %p52, %p53
      %p55 = scmp.ne.s32.totalorder %s47, %s50
      %p56 = scmp.eq.s32.totalorder %s16, 0
      %p57 = por %p55, %p56
      %p58 = scmp.ne.s32.totalorder %s47, %s50
      %p59 = scmp.eq.s32.totalorder %s21, 3
      %p60 = por %p58, %p59
      %p61 = scmp.ne.s32.totalorder %s50, %s51
      %p62 = scmp.eq.s32.totalorder %s21, 0
      %p63 = por %p61, %p62
      %p64 = scmp.ne.s32.totalorder %s50, %s51
      %p65 = scmp.eq.s32.totalorder %s22, 3
      %p66 = por %p64, %p65
      %p68 = scmp.ne.s32.totalorder %s51, %s67
      %p69 = scmp.eq.s32.totalorder %s22, 0
      %p70 = por %p68, %p69
      %s71 = ssub.s32 %s25, %s34
      %s72 = ssub.s32 %s24, %s38
      %s73 = sor.u32 %s71, %s72
      %p74 = scmp.eq.s32.totalorder %s73, 0
      %s76 = sadd.s32 %s75, 1
      %s77 = scalar_select %p74, %s75, %s76
      %p80 = pneg %p74
      %p81 = scmp.eq.s32.totalorder %s16, 3
      %p82 = por %p80, %p81
      %p83 = scmp.ne.s32.totalorder %s75, %s78
      %p84 = scmp.eq.s32.totalorder %s16, 0
      %p85 = por %p83, %p84
      %p86 = scmp.ne.s32.totalorder %s75, %s78
      %p87 = scmp.eq.s32.totalorder %s21, 3
      %p88 = por %p86, %p87
      %p89 = scmp.ne.s32.totalorder %s78, %s79
      %p90 = scmp.eq.s32.totalorder %s21, 0
      %p91 = por %p89, %p90
      %p92 = scmp.ne.s32.totalorder %s78, %s79
      %p93 = scmp.eq.s32.totalorder %s22, 3
      %p94 = por %p92, %p93
      %p96 = scmp.ne.s32.totalorder %s79, %s95
      %p97 = scmp.eq.s32.totalorder %s22, 0
      %p98 = por %p96, %p97
      %s99 = ssub.s32 %s24, %s38
      %p100 = scmp.eq.s32.totalorder %s99, 0
      %s102 = sadd.s32 %s101, 1
      %s103 = scalar_select %p100, %s101, %s102
      %p106 = pneg %p100
      %p107 = scmp.eq.s32.totalorder %s16, 3
      %p108 = por %p106, %p107
      %p109 = scmp.ne.s32.totalorder %s101, %s104
      %p110 = scmp.eq.s32.totalorder %s16, 0
      %p111 = por %p109, %p110
      %p112 = scmp.ne.s32.totalorder %s101, %s104
      %p113 = scmp.eq.s32.totalorder %s21, 3
      %p114 = por %p112, %p113
      %p115 = scmp.ne.s32.totalorder %s104, %s105
      %p116 = scmp.eq.s32.totalorder %s21, 0
      %p117 = por %p115, %p116
      %p118 = scmp.ne.s32.totalorder %s104, %s105
      %p119 = scmp.eq.s32.totalorder %s22, 3
      %p120 = por %p118, %p119
      %p122 = scmp.ne.s32.totalorder %s105, %s121
      %p123 = scmp.eq.s32.totalorder %s22, 0
      %p124 = por %p122, %p123
      %s125 = ssub.s32 %s23, %s42
      %s126 = ssub.s32 %s24, %s38
      %s127 = sor.u32 %s125, %s126
      %p128 = scmp.eq.s32.totalorder %s127, 0
      %s130 = sadd.s32 %s129, 1
      %s131 = scalar_select %p128, %s129, %s130
      %p134 = pneg %p128
      %p135 = scmp.eq.s32.totalorder %s16, 3
      %p136 = por %p134, %p135
      %p137 = scmp.ne.s32.totalorder %s129, %s132
      %p138 = scmp.eq.s32.totalorder %s16, 0
      %p139 = por %p137, %p138
      %p140 = scmp.ne.s32.totalorder %s129, %s132
      %p141 = scmp.eq.s32.totalorder %s21, 3
      %p142 = por %p140, %p141
      %p143 = scmp.ne.s32.totalorder %s132, %s133
      %p144 = scmp.eq.s32.totalorder %s21, 0
      %p145 = por %p143, %p144
      %p146 = scmp.ne.s32.totalorder %s132, %s133
      %p147 = scmp.eq.s32.totalorder %s22, 3
      %p148 = por %p146, %p147
      %p150 = scmp.ne.s32.totalorder %s133, %s149
      %p151 = scmp.eq.s32.totalorder %s22, 0
      %p152 = por %p150, %p151
      %p153 = scmp.le.s32.totalorder 1, %s16
      %p154 = scmp.lt.s32.totalorder %s16, 5
      %p155 = pnand %p153, %p154
      %p156 = pneg %p155
      // Predicated region
      $region9: #{tpu_custom_call.1} parent=5 // pred_check
        _
      $region10: #{tpu_custom_call.1} parent=5 // pred_check_branch
        %158 = sbr.rel (%p155) target = $region12
      $region11: #{tpu_custom_call.1} parent=5 // pred_region
        %s159 = ssub.s32 %s16, 1
        // Predicated region
        $region13: #{tpu_custom_call.1} parent=11 // pred_check
          %p160 = pneg %p117
        $region14: #{tpu_custom_call.1} parent=11 // pred_check_branch
          %162 = sbr.rel (%p160) target = $region16
        $region15: #{tpu_custom_call.1} parent=11 // pred_region
          %s163 = smul.u32 2, %s27
          %p164 = scmp.lt.s32.totalorder %s163, 1
          %s165 = scalar_select %p164, %s163, 1
          %s166 = scalar_lea.vmem %s2, %s165
          %s167 = smul.u32 2, %s27
        $region16: #{tpu_custom_call.1} parent=11 // pred_fallthru
          _
      $region12: #{tpu_custom_call.1} parent=5 // pred_fallthru
        _
      %p168 = scmp.lt.s32.totalorder %s16, 4
      // Predicated region
      $region17: #{tpu_custom_call.1} parent=5 // pred_check
        %p169 = pneg %p168
      $region18: #{tpu_custom_call.1} parent=5 // pred_check_branch
        %171 = sbr.rel (%p169) target = $region20
      $region19: #{tpu_custom_call.1} parent=5 // pred_region
        // Predicated region
        $region21: #{tpu_custom_call.1} parent=19 // pred_check
          %p172 = pneg %p57
        $region22: #{tpu_custom_call.1} parent=19 // pred_check_branch
          %174 = sbr.rel (%p172) target = $region24
        $region23: #{tpu_custom_call.1} parent=19 // pred_region
          %s175 = sand.u32 %s47, 1
          %s176 = scalar_lea.sflag [#allocation4], %s175
          %s177 = sand.u32 %s47, 1
          %s178 = smul.addr %s177, 512
          %s179 = scalar_lea.vmem [#allocation3], %s178
          %s180 = smul.u32 32, %s23
          %s181 = smul.u32 4, %s25
          %s183 = ssub.s32 8192, 8192
          %184 = vsyncadd %s176, %s183
          %s185 = smul.addr %s180, 16
          %s186 = sadd.s32 %s181, %s185
          %s187 = smul.addr %s186, 64
          %s188 = scalar_lea.hbm %s0, %s187
          %s189 = sshll.u32 %s179, 4
          %s190 = int_to_ptr.vmem [resolvable:$true] %s189
          %195 = dma.hbm_to_vmem [thread:$0]  %s188, 8192, %s190, %s176, 1024, 256, 16
        $region24: #{tpu_custom_call.1} parent=19 // pred_fallthru
          _
        // Predicated region
        $region25: #{tpu_custom_call.1} parent=19 // pred_check
          %p196 = pneg %p85
        $region26: #{tpu_custom_call.1} parent=19 // pred_check_branch
          %198 = sbr.rel (%p196) target = $region28
        $region27: #{tpu_custom_call.1} parent=19 // pred_region
          %s199 = sand.u32 %s75, 1
          %s200 = scalar_lea.sflag [#allocation7], %s199
          %s201 = sand.u32 %s75, 1
          %s202 = smul.addr %s201, 512
          %s203 = scalar_lea.vmem [#allocation6], %s202
          %s204 = smul.u32 64, %s25
          %s205 = smul.u32 2, %s24
          %s207 = ssub.s32 8192, 8192
          %208 = vsyncadd %s200, %s207
          %s209 = smul.addr %s204, 2
          %s210 = sadd.s32 %s205, %s209
          %s211 = smul.addr %s210, 64
          %s212 = scalar_lea.hbm %s1, %s211
          %s213 = sshll.u32 %s203, 4
          %s214 = int_to_ptr.vmem [resolvable:$true] %s213
          %219 = dma.hbm_to_vmem [thread:$0]  %s212, 8192, %s214, %s200, 128, 128, 8
        $region28: #{tpu_custom_call.1} parent=19 // pred_fallthru
          _
      $region20: #{tpu_custom_call.1} parent=5 // pred_fallthru
        _
      %p220 = scmp.le.s32.totalorder 1, %s16
      %p221 = scmp.lt.s32.totalorder %s16, 5
      %p222 = pnand %p220, %p221
      %p223 = pneg %p222
      // Predicated region
      $region29: #{tpu_custom_call.1} parent=5 // pred_check
        _
      $region30: #{tpu_custom_call.1} parent=5 // pred_check_branch
        %225 = sbr.rel (%p222) target = $region32
      $region31: #{tpu_custom_call.1} parent=5 // pred_region
        %s226 = ssub.s32 %s16, 1
        %s227 = sand.u32 %s50, 1
        %s228 = scalar_lea.sflag [#allocation4], %s227
        %s229 = sand.u32 %s50, 1
        %s230 = smul.addr %s229, 512
        %s231 = scalar_lea.vmem [#allocation3], %s230
        // Predicated region
        $region33: #{tpu_custom_call.1} parent=31 // pred_check
          %p232 = pneg %p63
        $region34: #{tpu_custom_call.1} parent=31 // pred_check_branch
          %234 = sbr.rel (%p232) target = $region36
        $region35: #{tpu_custom_call.1} parent=31 // pred_region
          %235 = dma.done %s228, 8192
        $region36: #{tpu_custom_call.1} parent=31 // pred_fallthru
          _
        %s236 = sand.u32 %s78, 1
        %s237 = scalar_lea.sflag [#allocation7], %s236
        %s238 = sand.u32 %s78, 1
        %s239 = smul.addr %s238, 512
        %s240 = scalar_lea.vmem [#allocation6], %s239
        // Predicated region
        $region37: #{tpu_custom_call.1} parent=31 // pred_check
          %p241 = pneg %p91
        $region38: #{tpu_custom_call.1} parent=31 // pred_check_branch
          %243 = sbr.rel (%p241) target = $region40
        $region39: #{tpu_custom_call.1} parent=31 // pred_region
          %244 = dma.done %s237, 8192
        $region40: #{tpu_custom_call.1} parent=31 // pred_fallthru
          _
        %s245 = sand.u32 %s50, 1
        %s246 = scalar_lea.sflag [#allocation4], %s245
        %s247 = sand.u32 %s50, 1
        %s248 = smul.addr %s247, 512
        %s249 = scalar_lea.vmem [#allocation3], %s248
        %p250 = pneg %p63
        %p251 = pneg %p60
        %s252 = sand.u32 %s78, 1
        %s253 = scalar_lea.sflag [#allocation7], %s252
        %s254 = sand.u32 %s78, 1
        %s255 = smul.addr %s254, 512
        %s256 = scalar_lea.vmem [#allocation6], %s255
        %p257 = pneg %p91
        %p258 = pneg %p88
        %s259 = smul.u32 2, %s27
        %p260 = scmp.lt.s32.totalorder %s259, 1
        %s261 = scalar_select %p260, %s259, 1
        %s262 = scalar_lea.vmem %s2, %s261
        %p263 = pneg %p117
        %p264 = pneg %p114
        %p265 = pneg %p145
        %p266 = pneg %p142
        %s267 = smul.u32 32, %s26
        %s268 = smul.u32 4, %s28
        %s269 = smul.u32 64, %s28
        %s270 = smul.u32 2, %s27
        %s271 = smul.u32 2, %s27
        %p272 = scmp.lt.s32.totalorder %s271, 1
        %s273 = scalar_select %p272, %s271, 1
        %s274 = scalar_lea.vmem %s2, %s273
        %s275 = smul.u32 2, %s27
        %s276 = smul.u32 32, %s26
        %s277 = smul.u32 2, %s27
        %p278 = scmp.eq.s32.totalorder %s28, 0
        // Predicated region
        $region41: #{tpu_custom_call.1} parent=31 // pred_check
          %p279 = pneg %p278
        $region42: #{tpu_custom_call.1} parent=31 // pred_check_branch
          %281 = sbr.rel (%p279) target = $region44
        $region43: #{tpu_custom_call.1} parent=31 // pred_region
          %282 = vst [vmem:[#allocation2] sm:$0xff] 0.0
          %283 = vst [vmem:[#allocation2 + $0x8] sm:$0xff] 0.0
          %284 = vst [vmem:[#allocation2 + $0x10] sm:$0xff] 0.0
          %285 = vst [vmem:[#allocation2 + $0x18] sm:$0xff] 0.0
          %286 = vst [vmem:[#allocation2 + $0x20] sm:$0xff] 0.0
          %287 = vst [vmem:[#allocation2 + $0x28] sm:$0xff] 0.0
          %288 = vst [vmem:[#allocation2 + $0x30] sm:$0xff] 0.0
          %289 = vst [vmem:[#allocation2 + $0x38] sm:$0xff] 0.0
          %290 = vst [vmem:[#allocation2 + $0x40] sm:$0xff] 0.0
          %291 = vst [vmem:[#allocation2 + $0x48] sm:$0xff] 0.0
          %292 = vst [vmem:[#allocation2 + $0x50] sm:$0xff] 0.0
          %293 = vst [vmem:[#allocation2 + $0x58] sm:$0xff] 0.0
          %294 = vst [vmem:[#allocation2 + $0x60] sm:$0xff] 0.0
          %295 = vst [vmem:[#allocation2 + $0x68] sm:$0xff] 0.0
          %296 = vst [vmem:[#allocation2 + $0x70] sm:$0xff] 0.0
          %297 = vst [vmem:[#allocation2 + $0x78] sm:$0xff] 0.0
          %298 = vst [vmem:[#allocation2 + $0x80] sm:$0xff] 0.0
          %299 = vst [vmem:[#allocation2 + $0x88] sm:$0xff] 0.0
          %300 = vst [vmem:[#allocation2 + $0x90] sm:$0xff] 0.0
          %301 = vst [vmem:[#allocation2 + $0x98] sm:$0xff] 0.0
          %302 = vst [vmem:[#allocation2 + $0xa0] sm:$0xff] 0.0
          %303 = vst [vmem:[#allocation2 + $0xa8] sm:$0xff] 0.0
          %304 = vst [vmem:[#allocation2 + $0xb0] sm:$0xff] 0.0
          %305 = vst [vmem:[#allocation2 + $0xb8] sm:$0xff] 0.0
          %306 = vst [vmem:[#allocation2 + $0xc0] sm:$0xff] 0.0
          %307 = vst [vmem:[#allocation2 + $0xc8] sm:$0xff] 0.0
          %308 = vst [vmem:[#allocation2 + $0xd0] sm:$0xff] 0.0
          %309 = vst [vmem:[#allocation2 + $0xd8] sm:$0xff] 0.0
          %310 = vst [vmem:[#allocation2 + $0xe0] sm:$0xff] 0.0
          %311 = vst [vmem:[#allocation2 + $0xe8] sm:$0xff] 0.0
          %312 = vst [vmem:[#allocation2 + $0xf0] sm:$0xff] 0.0
          %313 = vst [vmem:[#allocation2 + $0xf8] sm:$0xff] 0.0
          %314 = vst [vmem:[#allocation2 + $0x100] sm:$0xff] 0.0
          %315 = vst [vmem:[#allocation2 + $0x108] sm:$0xff] 0.0
          %316 = vst [vmem:[#allocation2 + $0x110] sm:$0xff] 0.0
          %317 = vst [vmem:[#allocation2 + $0x118] sm:$0xff] 0.0
          %318 = vst [vmem:[#allocation2 + $0x120] sm:$0xff] 0.0
          %319 = vst [vmem:[#allocation2 + $0x128] sm:$0xff] 0.0
          %320 = vst [vmem:[#allocation2 + $0x130] sm:$0xff] 0.0
          %321 = vst [vmem:[#allocation2 + $0x138] sm:$0xff] 0.0
          %322 = vst [vmem:[#allocation2 + $0x140] sm:$0xff] 0.0
          %323 = vst [vmem:[#allocation2 + $0x148] sm:$0xff] 0.0
          %324 = vst [vmem:[#allocation2 + $0x150] sm:$0xff] 0.0
          %325 = vst [vmem:[#allocation2 + $0x158] sm:$0xff] 0.0
          %326 = vst [vmem:[#allocation2 + $0x160] sm:$0xff] 0.0
          %327 = vst [vmem:[#allocation2 + $0x168] sm:$0xff] 0.0
          %328 = vst [vmem:[#allocation2 + $0x170] sm:$0xff] 0.0
          %329 = vst [vmem:[#allocation2 + $0x178] sm:$0xff] 0.0
          %330 = vst [vmem:[#allocation2 + $0x180] sm:$0xff] 0.0
          %331 = vst [vmem:[#allocation2 + $0x188] sm:$0xff] 0.0
          %332 = vst [vmem:[#allocation2 + $0x190] sm:$0xff] 0.0
          %333 = vst [vmem:[#allocation2 + $0x198] sm:$0xff] 0.0
          %334 = vst [vmem:[#allocation2 + $0x1a0] sm:$0xff] 0.0
          %335 = vst [vmem:[#allocation2 + $0x1a8] sm:$0xff] 0.0
          %336 = vst [vmem:[#allocation2 + $0x1b0] sm:$0xff] 0.0
          %337 = vst [vmem:[#allocation2 + $0x1b8] sm:$0xff] 0.0
          %338 = vst [vmem:[#allocation2 + $0x1c0] sm:$0xff] 0.0
          %339 = vst [vmem:[#allocation2 + $0x1c8] sm:$0xff] 0.0
          %340 = vst [vmem:[#allocation2 + $0x1d0] sm:$0xff] 0.0
          %341 = vst [vmem:[#allocation2 + $0x1d8] sm:$0xff] 0.0
          %342 = vst [vmem:[#allocation2 + $0x1e0] sm:$0xff] 0.0
          %343 = vst [vmem:[#allocation2 + $0x1e8] sm:$0xff] 0.0
          %344 = vst [vmem:[#allocation2 + $0x1f0] sm:$0xff] 0.0
          %345 = vst [vmem:[#allocation2 + $0x1f8] sm:$0xff] 0.0
        $region44: #{tpu_custom_call.1} parent=31 // pred_fallthru
          _
        %v346 = vld [vmem:[#allocation2] sm:$0xff]
        %v347 = vld [vmem:[#allocation2 + $0x8] sm:$0xff]
        %v348 = vld [vmem:[#allocation2 + $0x10] sm:$0xff]
        %v349 = vld [vmem:[#allocation2 + $0x18] sm:$0xff]
        %v350 = vld [vmem:[#allocation2 + $0x20] sm:$0xff]
        %v351 = vld [vmem:[#allocation2 + $0x28] sm:$0xff]
        %v352 = vld [vmem:[#allocation2 + $0x30] sm:$0xff]
        %v353 = vld [vmem:[#allocation2 + $0x38] sm:$0xff]
        %v354 = vld [vmem:[#allocation2 + $0x40] sm:$0xff]
        %v355 = vld [vmem:[#allocation2 + $0x48] sm:$0xff]
        %v356 = vld [vmem:[#allocation2 + $0x50] sm:$0xff]
        %v357 = vld [vmem:[#allocation2 + $0x58] sm:$0xff]
        %v358 = vld [vmem:[#allocation2 + $0x60] sm:$0xff]
        %v359 = vld [vmem:[#allocation2 + $0x68] sm:$0xff]
        %v360 = vld [vmem:[#allocation2 + $0x70] sm:$0xff]
        %v361 = vld [vmem:[#allocation2 + $0x78] sm:$0xff]
        %v362 = vld [vmem:[#allocation2 + $0x80] sm:$0xff]
        %v363 = vld [vmem:[#allocation2 + $0x88] sm:$0xff]
        %v364 = vld [vmem:[#allocation2 + $0x90] sm:$0xff]
        %v365 = vld [vmem:[#allocation2 + $0x98] sm:$0xff]
        %v366 = vld [vmem:[#allocation2 + $0xa0] sm:$0xff]
        %v367 = vld [vmem:[#allocation2 + $0xa8] sm:$0xff]
        %v368 = vld [vmem:[#allocation2 + $0xb0] sm:$0xff]
        %v369 = vld [vmem:[#allocation2 + $0xb8] sm:$0xff]
        %v370 = vld [vmem:[#allocation2 + $0xc0] sm:$0xff]
        %v371 = vld [vmem:[#allocation2 + $0xc8] sm:$0xff]
        %v372 = vld [vmem:[#allocation2 + $0xd0] sm:$0xff]
        %v373 = vld [vmem:[#allocation2 + $0xd8] sm:$0xff]
        %v374 = vld [vmem:[#allocation2 + $0xe0] sm:$0xff]
        %v375 = vld [vmem:[#allocation2 + $0xe8] sm:$0xff]
        %v376 = vld [vmem:[#allocation2 + $0xf0] sm:$0xff]
        %v377 = vld [vmem:[#allocation2 + $0xf8] sm:$0xff]
        %v378 = vld [vmem:[#allocation2 + $0x100] sm:$0xff]
        %v379 = vld [vmem:[#allocation2 + $0x108] sm:$0xff]
        %v380 = vld [vmem:[#allocation2 + $0x110] sm:$0xff]
        %v381 = vld [vmem:[#allocation2 + $0x118] sm:$0xff]
        %v382 = vld [vmem:[#allocation2 + $0x120] sm:$0xff]
        %v383 = vld [vmem:[#allocation2 + $0x128] sm:$0xff]
        %v384 = vld [vmem:[#allocation2 + $0x130] sm:$0xff]
        %v385 = vld [vmem:[#allocation2 + $0x138] sm:$0xff]
        %v386 = vld [vmem:[#allocation2 + $0x140] sm:$0xff]
        %v387 = vld [vmem:[#allocation2 + $0x148] sm:$0xff]
        %v388 = vld [vmem:[#allocation2 + $0x150] sm:$0xff]
        %v389 = vld [vmem:[#allocation2 + $0x158] sm:$0xff]
        %v390 = vld [vmem:[#allocation2 + $0x160] sm:$0xff]
        %v391 = vld [vmem:[#allocation2 + $0x168] sm:$0xff]
        %v392 = vld [vmem:[#allocation2 + $0x170] sm:$0xff]
        %v393 = vld [vmem:[#allocation2 + $0x178] sm:$0xff]
        %v394 = vld [vmem:[#allocation2 + $0x180] sm:$0xff]
        %v395 = vld [vmem:[#allocation2 + $0x188] sm:$0xff]
        %v396 = vld [vmem:[#allocation2 + $0x190] sm:$0xff]
        %v397 = vld [vmem:[#allocation2 + $0x198] sm:$0xff]
        %v398 = vld [vmem:[#allocation2 + $0x1a0] sm:$0xff]
        %v399 = vld [vmem:[#allocation2 + $0x1a8] sm:$0xff]
        %v400 = vld [vmem:[#allocation2 + $0x1b0] sm:$0xff]
        %v401 = vld [vmem:[#allocation2 + $0x1b8] sm:$0xff]
        %v402 = vld [vmem:[#allocation2 + $0x1c0] sm:$0xff]
        %v403 = vld [vmem:[#allocation2 + $0x1c8] sm:$0xff]
        %v404 = vld [vmem:[#allocation2 + $0x1d0] sm:$0xff]
        %v405 = vld [vmem:[#allocation2 + $0x1d8] sm:$0xff]
        %v406 = vld [vmem:[#allocation2 + $0x1e0] sm:$0xff]
        %v407 = vld [vmem:[#allocation2 + $0x1e8] sm:$0xff]
        %v408 = vld [vmem:[#allocation2 + $0x1f0] sm:$0xff]
        %v409 = vld [vmem:[#allocation2 + $0x1f8] sm:$0xff]
        %v410 = vld [vmem:[%s231] sm:$0xff]
        %v411 = vld [vmem:[%s231 + $0x8] sm:$0xff]
        %v412 = vld [vmem:[%s231 + $0x10] sm:$0xff]
        %v413 = vld [vmem:[%s231 + $0x18] sm:$0xff]
        %v414 = vld [vmem:[%s231 + $0x20] sm:$0xff]
        %v415 = vld [vmem:[%s231 + $0x28] sm:$0xff]
        %v416 = vld [vmem:[%s231 + $0x30] sm:$0xff]
        %v417 = vld [vmem:[%s231 + $0x38] sm:$0xff]
        %v418 = vld [vmem:[%s231 + $0x40] sm:$0xff]
        %v419 = vld [vmem:[%s231 + $0x48] sm:$0xff]
        %v420 = vld [vmem:[%s231 + $0x50] sm:$0xff]
        %v421 = vld [vmem:[%s231 + $0x58] sm:$0xff]
        %v422 = vld [vmem:[%s231 + $0x60] sm:$0xff]
        %v423 = vld [vmem:[%s231 + $0x68] sm:$0xff]
        %v424 = vld [vmem:[%s231 + $0x70] sm:$0xff]
        %v425 = vld [vmem:[%s231 + $0x78] sm:$0xff]
        %v426 = vld [vmem:[%s231 + $0x80] sm:$0xff]
        %v427 = vld [vmem:[%s231 + $0x88] sm:$0xff]
        %v428 = vld [vmem:[%s231 + $0x90] sm:$0xff]
        %v429 = vld [vmem:[%s231 + $0x98] sm:$0xff]
        %v430 = vld [vmem:[%s231 + $0xa0] sm:$0xff]
        %v431 = vld [vmem:[%s231 + $0xa8] sm:$0xff]
        %v432 = vld [vmem:[%s231 + $0xb0] sm:$0xff]
        %v433 = vld [vmem:[%s231 + $0xb8] sm:$0xff]
        %v434 = vld [vmem:[%s231 + $0xc0] sm:$0xff]
        %v435 = vld [vmem:[%s231 + $0xc8] sm:$0xff]
        %v436 = vld [vmem:[%s231 + $0xd0] sm:$0xff]
        %v437 = vld [vmem:[%s231 + $0xd8] sm:$0xff]
        %v438 = vld [vmem:[%s231 + $0xe0] sm:$0xff]
        %v439 = vld [vmem:[%s231 + $0xe8] sm:$0xff]
        %v440 = vld [vmem:[%s231 + $0xf0] sm:$0xff]
        %v441 = vld [vmem:[%s231 + $0xf8] sm:$0xff]
        %v442 = vld [vmem:[%s231 + $0x100] sm:$0xff]
        %v443 = vld [vmem:[%s231 + $0x108] sm:$0xff]
        %v444 = vld [vmem:[%s231 + $0x110] sm:$0xff]
        %v445 = vld [vmem:[%s231 + $0x118] sm:$0xff]
        %v446 = vld [vmem:[%s231 + $0x120] sm:$0xff]
        %v447 = vld [vmem:[%s231 + $0x128] sm:$0xff]
        %v448 = vld [vmem:[%s231 + $0x130] sm:$0xff]
        %v449 = vld [vmem:[%s231 + $0x138] sm:$0xff]
        %v450 = vld [vmem:[%s231 + $0x140] sm:$0xff]
        %v451 = vld [vmem:[%s231 + $0x148] sm:$0xff]
        %v452 = vld [vmem:[%s231 + $0x150] sm:$0xff]
        %v453 = vld [vmem:[%s231 + $0x158] sm:$0xff]
        %v454 = vld [vmem:[%s231 + $0x160] sm:$0xff]
        %v455 = vld [vmem:[%s231 + $0x168] sm:$0xff]
        %v456 = vld [vmem:[%s231 + $0x170] sm:$0xff]
        %v457 = vld [vmem:[%s231 + $0x178] sm:$0xff]
        %v458 = vld [vmem:[%s231 + $0x180] sm:$0xff]
        %v459 = vld [vmem:[%s231 + $0x188] sm:$0xff]
        %v460 = vld [vmem:[%s231 + $0x190] sm:$0xff]
        %v461 = vld [vmem:[%s231 + $0x198] sm:$0xff]
        %v462 = vld [vmem:[%s231 + $0x1a0] sm:$0xff]
        %v463 = vld [vmem:[%s231 + $0x1a8] sm:$0xff]
        %v464 = vld [vmem:[%s231 + $0x1b0] sm:$0xff]
        %v465 = vld [vmem:[%s231 + $0x1b8] sm:$0xff]
        %v466 = vld [vmem:[%s231 + $0x1c0] sm:$0xff]
        %v467 = vld [vmem:[%s231 + $0x1c8] sm:$0xff]
        %v468 = vld [vmem:[%s231 + $0x1d0] sm:$0xff]
        %v469 = vld [vmem:[%s231 + $0x1d8] sm:$0xff]
        %v470 = vld [vmem:[%s231 + $0x1e0] sm:$0xff]
        %v471 = vld [vmem:[%s231 + $0x1e8] sm:$0xff]
        %v472 = vld [vmem:[%s231 + $0x1f0] sm:$0xff]
        %v473 = vld [vmem:[%s231 + $0x1f8] sm:$0xff]
        %v474 = vld [vmem:[%s240] sm:$0xff]
        %v475 = vld [vmem:[%s240 + $0x8] sm:$0xff]
        %v476 = vld [vmem:[%s240 + $0x10] sm:$0xff]
        %v477 = vld [vmem:[%s240 + $0x18] sm:$0xff]
        %v478 = vld [vmem:[%s240 + $0x20] sm:$0xff]
        %v479 = vld [vmem:[%s240 + $0x28] sm:$0xff]
        %v480 = vld [vmem:[%s240 + $0x30] sm:$0xff]
        %v481 = vld [vmem:[%s240 + $0x38] sm:$0xff]
        %v482 = vld [vmem:[%s240 + $0x40] sm:$0xff]
        %v483 = vld [vmem:[%s240 + $0x48] sm:$0xff]
        %v484 = vld [vmem:[%s240 + $0x50] sm:$0xff]
        %v485 = vld [vmem:[%s240 + $0x58] sm:$0xff]
        %v486 = vld [vmem:[%s240 + $0x60] sm:$0xff]
        %v487 = vld [vmem:[%s240 + $0x68] sm:$0xff]
        %v488 = vld [vmem:[%s240 + $0x70] sm:$0xff]
        %v489 = vld [vmem:[%s240 + $0x78] sm:$0xff]
        %v490 = vld [vmem:[%s240 + $0x80] sm:$0xff]
        %v491 = vld [vmem:[%s240 + $0x88] sm:$0xff]
        %v492 = vld [vmem:[%s240 + $0x90] sm:$0xff]
        %v493 = vld [vmem:[%s240 + $0x98] sm:$0xff]
        %v494 = vld [vmem:[%s240 + $0xa0] sm:$0xff]
        %v495 = vld [vmem:[%s240 + $0xa8] sm:$0xff]
        %v496 = vld [vmem:[%s240 + $0xb0] sm:$0xff]
        %v497 = vld [vmem:[%s240 + $0xb8] sm:$0xff]
        %v498 = vld [vmem:[%s240 + $0xc0] sm:$0xff]
        %v499 = vld [vmem:[%s240 + $0xc8] sm:$0xff]
        %v500 = vld [vmem:[%s240 + $0xd0] sm:$0xff]
        %v501 = vld [vmem:[%s240 + $0xd8] sm:$0xff]
        %v502 = vld [vmem:[%s240 + $0xe0] sm:$0xff]
        %v503 = vld [vmem:[%s240 + $0xe8] sm:$0xff]
        %v504 = vld [vmem:[%s240 + $0xf0] sm:$0xff]
        %v505 = vld [vmem:[%s240 + $0xf8] sm:$0xff]
        %v506 = vld [vmem:[%s240 + $0x100] sm:$0xff]
        %v507 = vld [vmem:[%s240 + $0x108] sm:$0xff]
        %v508 = vld [vmem:[%s240 + $0x110] sm:$0xff]
        %v509 = vld [vmem:[%s240 + $0x118] sm:$0xff]
        %v510 = vld [vmem:[%s240 + $0x120] sm:$0xff]
        %v511 = vld [vmem:[%s240 + $0x128] sm:$0xff]
        %v512 = vld [vmem:[%s240 + $0x130] sm:$0xff]
        %v513 = vld [vmem:[%s240 + $0x138] sm:$0xff]
        %v514 = vld [vmem:[%s240 + $0x140] sm:$0xff]
        %v515 = vld [vmem:[%s240 + $0x148] sm:$0xff]
        %v516 = vld [vmem:[%s240 + $0x150] sm:$0xff]
        %v517 = vld [vmem:[%s240 + $0x158] sm:$0xff]
        %v518 = vld [vmem:[%s240 + $0x160] sm:$0xff]
        %v519 = vld [vmem:[%s240 + $0x168] sm:$0xff]
        %v520 = vld [vmem:[%s240 + $0x170] sm:$0xff]
        %v521 = vld [vmem:[%s240 + $0x178] sm:$0xff]
        %v522 = vld [vmem:[%s240 + $0x180] sm:$0xff]
        %v523 = vld [vmem:[%s240 + $0x188] sm:$0xff]
        %v524 = vld [vmem:[%s240 + $0x190] sm:$0xff]
        %v525 = vld [vmem:[%s240 + $0x198] sm:$0xff]
        %v526 = vld [vmem:[%s240 + $0x1a0] sm:$0xff]
        %v527 = vld [vmem:[%s240 + $0x1a8] sm:$0xff]
        %v528 = vld [vmem:[%s240 + $0x1b0] sm:$0xff]
        %v529 = vld [vmem:[%s240 + $0x1b8] sm:$0xff]
        %v530 = vld [vmem:[%s240 + $0x1c0] sm:$0xff]
        %v531 = vld [vmem:[%s240 + $0x1c8] sm:$0xff]
        %v532 = vld [vmem:[%s240 + $0x1d0] sm:$0xff]
        %v533 = vld [vmem:[%s240 + $0x1d8] sm:$0xff]
        %v534 = vld [vmem:[%s240 + $0x1e0] sm:$0xff]
        %v535 = vld [vmem:[%s240 + $0x1e8] sm:$0xff]
        %v536 = vld [vmem:[%s240 + $0x1f0] sm:$0xff]
        %v537 = vld [vmem:[%s240 + $0x1f8] sm:$0xff]
        %v602 = vunpack.c.l.b16 %v410
        %v603 = vunpack.c.h.b16 %v410
        %v604 = vunpack.c.l.b16 %v411
        %v605 = vunpack.c.h.b16 %v411
        %v606 = vunpack.c.l.b16 %v412
        %v607 = vunpack.c.h.b16 %v412
        %v608 = vunpack.c.l.b16 %v413
        %v609 = vunpack.c.h.b16 %v413
        %v610 = vunpack.c.l.b16 %v414
        %v611 = vunpack.c.h.b16 %v414
        %v612 = vunpack.c.l.b16 %v415
        %v613 = vunpack.c.h.b16 %v415
        %v614 = vunpack.c.l.b16 %v416
        %v615 = vunpack.c.h.b16 %v416
        %v616 = vunpack.c.l.b16 %v417
        %v617 = vunpack.c.h.b16 %v417
        %v618 = vunpack.c.l.b16 %v418
        %v619 = vunpack.c.h.b16 %v418
        %v620 = vunpack.c.l.b16 %v419
        %v621 = vunpack.c.h.b16 %v419
        %v622 = vunpack.c.l.b16 %v420
        %v623 = vunpack.c.h.b16 %v420
        %v624 = vunpack.c.l.b16 %v421
        %v625 = vunpack.c.h.b16 %v421
        %v626 = vunpack.c.l.b16 %v422
        %v627 = vunpack.c.h.b16 %v422
        %v628 = vunpack.c.l.b16 %v423
        %v629 = vunpack.c.h.b16 %v423
        %v630 = vunpack.c.l.b16 %v424
        %v631 = vunpack.c.h.b16 %v424
        %v632 = vunpack.c.l.b16 %v425
        %v633 = vunpack.c.h.b16 %v425
        %v634 = vunpack.c.l.b16 %v426
        %v635 = vunpack.c.h.b16 %v426
        %v636 = vunpack.c.l.b16 %v427
        %v637 = vunpack.c.h.b16 %v427
        %v638 = vunpack.c.l.b16 %v428
        %v639 = vunpack.c.h.b16 %v428
        %v640 = vunpack.c.l.b16 %v429
        %v641 = vunpack.c.h.b16 %v429
        %v642 = vunpack.c.l.b16 %v430
        %v643 = vunpack.c.h.b16 %v430
        %v644 = vunpack.c.l.b16 %v431
        %v645 = vunpack.c.h.b16 %v431
        %v646 = vunpack.c.l.b16 %v432
        %v647 = vunpack.c.h.b16 %v432
        %v648 = vunpack.c.l.b16 %v433
        %v649 = vunpack.c.h.b16 %v433
        %v650 = vunpack.c.l.b16 %v434
        %v651 = vunpack.c.h.b16 %v434
        %v652 = vunpack.c.l.b16 %v435
        %v653 = vunpack.c.h.b16 %v435
        %v654 = vunpack.c.l.b16 %v436
        %v655 = vunpack.c.h.b16 %v436
        %v656 = vunpack.c.l.b16 %v437
        %v657 = vunpack.c.h.b16 %v437
        %v658 = vunpack.c.l.b16 %v438
        %v659 = vunpack.c.h.b16 %v438
        %v660 = vunpack.c.l.b16 %v439
        %v661 = vunpack.c.h.b16 %v439
        %v662 = vunpack.c.l.b16 %v440
        %v663 = vunpack.c.h.b16 %v440
        %v664 = vunpack.c.l.b16 %v441
        %v665 = vunpack.c.h.b16 %v441
        %v666 = vunpack.c.l.b16 %v442
        %v667 = vunpack.c.h.b16 %v442
        %v668 = vunpack.c.l.b16 %v443
        %v669 = vunpack.c.h.b16 %v443
        %v670 = vunpack.c.l.b16 %v444
        %v671 = vunpack.c.h.b16 %v444
        %v672 = vunpack.c.l.b16 %v445
        %v673 = vunpack.c.h.b16 %v445
        %v674 = vunpack.c.l.b16 %v446
        %v675 = vunpack.c.h.b16 %v446
        %v676 = vunpack.c.l.b16 %v447
        %v677 = vunpack.c.h.b16 %v447
        %v678 = vunpack.c.l.b16 %v448
        %v679 = vunpack.c.h.b16 %v448
        %v680 = vunpack.c.l.b16 %v449
        %v681 = vunpack.c.h.b16 %v449
        %v682 = vunpack.c.l.b16 %v450
        %v683 = vunpack.c.h.b16 %v450
        %v684 = vunpack.c.l.b16 %v451
        %v685 = vunpack.c.h.b16 %v451
        %v686 = vunpack.c.l.b16 %v452
        %v687 = vunpack.c.h.b16 %v452
        %v688 = vunpack.c.l.b16 %v453
        %v689 = vunpack.c.h.b16 %v453
        %v690 = vunpack.c.l.b16 %v454
        %v691 = vunpack.c.h.b16 %v454
        %v692 = vunpack.c.l.b16 %v455
        %v693 = vunpack.c.h.b16 %v455
        %v694 = vunpack.c.l.b16 %v456
        %v695 = vunpack.c.h.b16 %v456
        %v696 = vunpack.c.l.b16 %v457
        %v697 = vunpack.c.h.b16 %v457
        %v698 = vunpack.c.l.b16 %v458
        %v699 = vunpack.c.h.b16 %v458
        %v700 = vunpack.c.l.b16 %v459
        %v701 = vunpack.c.h.b16 %v459
        %v702 = vunpack.c.l.b16 %v460
        %v703 = vunpack.c.h.b16 %v460
        %v704 = vunpack.c.l.b16 %v461
        %v705 = vunpack.c.h.b16 %v461
        %v706 = vunpack.c.l.b16 %v462
        %v707 = vunpack.c.h.b16 %v462
        %v708 = vunpack.c.l.b16 %v463
        %v709 = vunpack.c.h.b16 %v463
        %v710 = vunpack.c.l.b16 %v464
        %v711 = vunpack.c.h.b16 %v464
        %v712 = vunpack.c.l.b16 %v465
        %v713 = vunpack.c.h.b16 %v465
        %v714 = vunpack.c.l.b16 %v466
        %v715 = vunpack.c.h.b16 %v466
        %v716 = vunpack.c.l.b16 %v467
        %v717 = vunpack.c.h.b16 %v467
        %v718 = vunpack.c.l.b16 %v468
        %v719 = vunpack.c.h.b16 %v468
        %v720 = vunpack.c.l.b16 %v469
        %v721 = vunpack.c.h.b16 %v469
        %v722 = vunpack.c.l.b16 %v470
        %v723 = vunpack.c.h.b16 %v470
        %v724 = vunpack.c.l.b16 %v471
        %v725 = vunpack.c.h.b16 %v471
        %v726 = vunpack.c.l.b16 %v472
        %v727 = vunpack.c.h.b16 %v472
        %v728 = vunpack.c.l.b16 %v473
        %v729 = vunpack.c.h.b16 %v473
        %v730 = vpack.c.b16 %v606, %v602
        %v731 = vpack.c.b16 %v607, %v603
        %v732 = vpack.c.b16 %v608, %v604
        %v733 = vpack.c.b16 %v609, %v605
        %v734 = vpack.c.b16 %v614, %v610
        %v735 = vpack.c.b16 %v615, %v611
        %v736 = vpack.c.b16 %v616, %v612
        %v737 = vpack.c.b16 %v617, %v613
        %v738 = vpack.c.b16 %v622, %v618
        %v739 = vpack.c.b16 %v623, %v619
        %v740 = vpack.c.b16 %v624, %v620
        %v741 = vpack.c.b16 %v625, %v621
        %v742 = vpack.c.b16 %v630, %v626
        %v743 = vpack.c.b16 %v631, %v627
        %v744 = vpack.c.b16 %v632, %v628
        %v745 = vpack.c.b16 %v633, %v629
        %v746 = vpack.c.b16 %v638, %v634
        %v747 = vpack.c.b16 %v639, %v635
        %v748 = vpack.c.b16 %v640, %v636
        %v749 = vpack.c.b16 %v641, %v637
        %v750 = vpack.c.b16 %v646, %v642
        %v751 = vpack.c.b16 %v647, %v643
        %v752 = vpack.c.b16 %v648, %v644
        %v753 = vpack.c.b16 %v649, %v645
        %v754 = vpack.c.b16 %v654, %v650
        %v755 = vpack.c.b16 %v655, %v651
        %v756 = vpack.c.b16 %v656, %v652
        %v757 = vpack.c.b16 %v657, %v653
        %v758 = vpack.c.b16 %v662, %v658
        %v759 = vpack.c.b16 %v663, %v659
        %v760 = vpack.c.b16 %v664, %v660
        %v761 = vpack.c.b16 %v665, %v661
        %v762 = vpack.c.b16 %v670, %v666
        %v763 = vpack.c.b16 %v671, %v667
        %v764 = vpack.c.b16 %v672, %v668
        %v765 = vpack.c.b16 %v673, %v669
        %v766 = vpack.c.b16 %v678, %v674
        %v767 = vpack.c.b16 %v679, %v675
        %v768 = vpack.c.b16 %v680, %v676
        %v769 = vpack.c.b16 %v681, %v677
        %v770 = vpack.c.b16 %v686, %v682
        %v771 = vpack.c.b16 %v687, %v683
        %v772 = vpack.c.b16 %v688, %v684
        %v773 = vpack.c.b16 %v689, %v685
        %v774 = vpack.c.b16 %v694, %v690
        %v775 = vpack.c.b16 %v695, %v691
        %v776 = vpack.c.b16 %v696, %v692
        %v777 = vpack.c.b16 %v697, %v693
        %v778 = vpack.c.b16 %v702, %v698
        %v779 = vpack.c.b16 %v703, %v699
        %v780 = vpack.c.b16 %v704, %v700
        %v781 = vpack.c.b16 %v705, %v701
        %v782 = vpack.c.b16 %v710, %v706
        %v783 = vpack.c.b16 %v711, %v707
        %v784 = vpack.c.b16 %v712, %v708
        %v785 = vpack.c.b16 %v713, %v709
        %v786 = vpack.c.b16 %v718, %v714
        %v787 = vpack.c.b16 %v719, %v715
        %v788 = vpack.c.b16 %v720, %v716
        %v789 = vpack.c.b16 %v721, %v717
        %v790 = vpack.c.b16 %v726, %v722
        %v791 = vpack.c.b16 %v727, %v723
        %v792 = vpack.c.b16 %v728, %v724
        %v793 = vpack.c.b16 %v729, %v725
        %v922 = vunpack.c.l.b16 %v474
        %v923 = vunpack.c.h.b16 %v474
        %v924 = vunpack.c.l.b16 %v475
        %v925 = vunpack.c.h.b16 %v475
        %v926 = vunpack.c.l.b16 %v476
        %v927 = vunpack.c.h.b16 %v476
        %v928 = vunpack.c.l.b16 %v477
        %v929 = vunpack.c.h.b16 %v477
        %v930 = vunpack.c.l.b16 %v478
        %v931 = vunpack.c.h.b16 %v478
        %v932 = vunpack.c.l.b16 %v479
        %v933 = vunpack.c.h.b16 %v479
        %v934 = vunpack.c.l.b16 %v480
        %v935 = vunpack.c.h.b16 %v480
        %v936 = vunpack.c.l.b16 %v481
        %v937 = vunpack.c.h.b16 %v481
        %v938 = vunpack.c.l.b16 %v482
        %v939 = vunpack.c.h.b16 %v482
        %v940 = vunpack.c.l.b16 %v483
        %v941 = vunpack.c.h.b16 %v483
        %v942 = vunpack.c.l.b16 %v484
        %v943 = vunpack.c.h.b16 %v484
        %v944 = vunpack.c.l.b16 %v485
        %v945 = vunpack.c.h.b16 %v485
        %v946 = vunpack.c.l.b16 %v486
        %v947 = vunpack.c.h.b16 %v486
        %v948 = vunpack.c.l.b16 %v487
        %v949 = vunpack.c.h.b16 %v487
        %v950 = vunpack.c.l.b16 %v488
        %v951 = vunpack.c.h.b16 %v488
        %v952 = vunpack.c.l.b16 %v489
        %v953 = vunpack.c.h.b16 %v489
        %v954 = vunpack.c.l.b16 %v490
        %v955 = vunpack.c.h.b16 %v490
        %v956 = vunpack.c.l.b16 %v491
        %v957 = vunpack.c.h.b16 %v491
        %v958 = vunpack.c.l.b16 %v492
        %v959 = vunpack.c.h.b16 %v492
        %v960 = vunpack.c.l.b16 %v493
        %v961 = vunpack.c.h.b16 %v493
        %v962 = vunpack.c.l.b16 %v494
        %v963 = vunpack.c.h.b16 %v494
        %v964 = vunpack.c.l.b16 %v495
        %v965 = vunpack.c.h.b16 %v495
        %v966 = vunpack.c.l.b16 %v496
        %v967 = vunpack.c.h.b16 %v496
        %v968 = vunpack.c.l.b16 %v497
        %v969 = vunpack.c.h.b16 %v497
        %v970 = vunpack.c.l.b16 %v498
        %v971 = vunpack.c.h.b16 %v498
        %v972 = vunpack.c.l.b16 %v499
        %v973 = vunpack.c.h.b16 %v499
        %v974 = vunpack.c.l.b16 %v500
        %v975 = vunpack.c.h.b16 %v500
        %v976 = vunpack.c.l.b16 %v501
        %v977 = vunpack.c.h.b16 %v501
        %v978 = vunpack.c.l.b16 %v502
        %v979 = vunpack.c.h.b16 %v502
        %v980 = vunpack.c.l.b16 %v503
        %v981 = vunpack.c.h.b16 %v503
        %v982 = vunpack.c.l.b16 %v504
        %v983 = vunpack.c.h.b16 %v504
        %v984 = vunpack.c.l.b16 %v505
        %v985 = vunpack.c.h.b16 %v505
        %v986 = vunpack.c.l.b16 %v506
        %v987 = vunpack.c.h.b16 %v506
        %v988 = vunpack.c.l.b16 %v507
        %v989 = vunpack.c.h.b16 %v507
        %v990 = vunpack.c.l.b16 %v508
        %v991 = vunpack.c.h.b16 %v508
        %v992 = vunpack.c.l.b16 %v509
        %v993 = vunpack.c.h.b16 %v509
        %v994 = vunpack.c.l.b16 %v510
        %v995 = vunpack.c.h.b16 %v510
        %v996 = vunpack.c.l.b16 %v511
        %v997 = vunpack.c.h.b16 %v511
        %v998 = vunpack.c.l.b16 %v512
        %v999 = vunpack.c.h.b16 %v512
        %v1000 = vunpack.c.l.b16 %v513
        %v1001 = vunpack.c.h.b16 %v513
        %v1002 = vunpack.c.l.b16 %v514
        %v1003 = vunpack.c.h.b16 %v514
        %v1004 = vunpack.c.l.b16 %v515
        %v1005 = vunpack.c.h.b16 %v515
        %v1006 = vunpack.c.l.b16 %v516
        %v1007 = vunpack.c.h.b16 %v516
        %v1008 = vunpack.c.l.b16 %v517
        %v1009 = vunpack.c.h.b16 %v517
        %v1010 = vunpack.c.l.b16 %v518
        %v1011 = vunpack.c.h.b16 %v518
        %v1012 = vunpack.c.l.b16 %v519
        %v1013 = vunpack.c.h.b16 %v519
        %v1014 = vunpack.c.l.b16 %v520
        %v1015 = vunpack.c.h.b16 %v520
        %v1016 = vunpack.c.l.b16 %v521
        %v1017 = vunpack.c.h.b16 %v521
        %v1018 = vunpack.c.l.b16 %v522
        %v1019 = vunpack.c.h.b16 %v522
        %v1020 = vunpack.c.l.b16 %v523
        %v1021 = vunpack.c.h.b16 %v523
        %v1022 = vunpack.c.l.b16 %v524
        %v1023 = vunpack.c.h.b16 %v524
        %v1024 = vunpack.c.l.b16 %v525
        %v1025 = vunpack.c.h.b16 %v525
        %v1026 = vunpack.c.l.b16 %v526
        %v1027 = vunpack.c.h.b16 %v526
        %v1028 = vunpack.c.l.b16 %v527
        %v1029 = vunpack.c.h.b16 %v527
        %v1030 = vunpack.c.l.b16 %v528
        %v1031 = vunpack.c.h.b16 %v528
        %v1032 = vunpack.c.l.b16 %v529
        %v1033 = vunpack.c.h.b16 %v529
        %v1034 = vunpack.c.l.b16 %v530
        %v1035 = vunpack.c.h.b16 %v530
        %v1036 = vunpack.c.l.b16 %v531
        %v1037 = vunpack.c.h.b16 %v531
        %v1038 = vunpack.c.l.b16 %v532
        %v1039 = vunpack.c.h.b16 %v532
        %v1040 = vunpack.c.l.b16 %v533
        %v1041 = vunpack.c.h.b16 %v533
        %v1042 = vunpack.c.l.b16 %v534
        %v1043 = vunpack.c.h.b16 %v534
        %v1044 = vunpack.c.l.b16 %v535
        %v1045 = vunpack.c.h.b16 %v535
        %v1046 = vunpack.c.l.b16 %v536
        %v1047 = vunpack.c.h.b16 %v536
        %v1048 = vunpack.c.l.b16 %v537
        %v1049 = vunpack.c.h.b16 %v537
        %v1050 = vpack.c.b16 %v924, %v922
        %v1051 = vpack.c.b16 %v925, %v923
        %v1052 = vpack.c.b16 %v928, %v926
        %v1053 = vpack.c.b16 %v929, %v927
        %v1054 = vpack.c.b16 %v932, %v930
        %v1055 = vpack.c.b16 %v933, %v931
        %v1056 = vpack.c.b16 %v936, %v934
        %v1057 = vpack.c.b16 %v937, %v935
        %v1058 = vpack.c.b16 %v940, %v938
        %v1059 = vpack.c.b16 %v941, %v939
        %v1060 = vpack.c.b16 %v944, %v942
        %v1061 = vpack.c.b16 %v945, %v943
        %v1062 = vpack.c.b16 %v948, %v946
        %v1063 = vpack.c.b16 %v949, %v947
        %v1064 = vpack.c.b16 %v952, %v950
        %v1065 = vpack.c.b16 %v953, %v951
        %v1066 = vpack.c.b16 %v956, %v954
        %v1067 = vpack.c.b16 %v957, %v955
        %v1068 = vpack.c.b16 %v960, %v958
        %v1069 = vpack.c.b16 %v961, %v959
        %v1070 = vpack.c.b16 %v964, %v962
        %v1071 = vpack.c.b16 %v965, %v963
        %v1072 = vpack.c.b16 %v968, %v966
        %v1073 = vpack.c.b16 %v969, %v967
        %v1074 = vpack.c.b16 %v972, %v970
        %v1075 = vpack.c.b16 %v973, %v971
        %v1076 = vpack.c.b16 %v976, %v974
        %v1077 = vpack.c.b16 %v977, %v975
        %v1078 = vpack.c.b16 %v980, %v978
        %v1079 = vpack.c.b16 %v981, %v979
        %v1080 = vpack.c.b16 %v984, %v982
        %v1081 = vpack.c.b16 %v985, %v983
        %v1082 = vpack.c.b16 %v988, %v986
        %v1083 = vpack.c.b16 %v989, %v987
        %v1084 = vpack.c.b16 %v992, %v990
        %v1085 = vpack.c.b16 %v993, %v991
        %v1086 = vpack.c.b16 %v996, %v994
        %v1087 = vpack.c.b16 %v997, %v995
        %v1088 = vpack.c.b16 %v1000, %v998
        %v1089 = vpack.c.b16 %v1001, %v999
        %v1090 = vpack.c.b16 %v1004, %v1002
        %v1091 = vpack.c.b16 %v1005, %v1003
        %v1092 = vpack.c.b16 %v1008, %v1006
        %v1093 = vpack.c.b16 %v1009, %v1007
        %v1094 = vpack.c.b16 %v1012, %v1010
        %v1095 = vpack.c.b16 %v1013, %v1011
        %v1096 = vpack.c.b16 %v1016, %v1014
        %v1097 = vpack.c.b16 %v1017, %v1015
        %v1098 = vpack.c.b16 %v1020, %v1018
        %v1099 = vpack.c.b16 %v1021, %v1019
        %v1100 = vpack.c.b16 %v1024, %v1022
        %v1101 = vpack.c.b16 %v1025, %v1023
        %v1102 = vpack.c.b16 %v1028, %v1026
        %v1103 = vpack.c.b16 %v1029, %v1027
        %v1104 = vpack.c.b16 %v1032, %v1030
        %v1105 = vpack.c.b16 %v1033, %v1031
        %v1106 = vpack.c.b16 %v1036, %v1034
        %v1107 = vpack.c.b16 %v1037, %v1035
        %v1108 = vpack.c.b16 %v1040, %v1038
        %v1109 = vpack.c.b16 %v1041, %v1039
        %v1110 = vpack.c.b16 %v1044, %v1042
        %v1111 = vpack.c.b16 %v1045, %v1043
        %v1112 = vpack.c.b16 %v1048, %v1046
        %v1113 = vpack.c.b16 %v1049, %v1047
        %1178 = vmatprep.subr.bf16.mxu0 %v1051
        %1179 = vmatpush1.bf16.msra.mxu0 %v1050
        %1180 = vmatprep.subr.bf16.mxu0 %v1053
        %1181 = vmatpush1.bf16.msra.mxu0 %v1052
        %1182 = vmatprep.subr.bf16.mxu0 %v1055
        %1183 = vmatpush1.bf16.msra.mxu0 %v1054
        %1184 = vmatprep.subr.bf16.mxu0 %v1057
        %1185 = vmatpush1.bf16.msra.mxu0 %v1056
        %1186 = vmatprep.subr.bf16.mxu0 %v1059
        %1187 = vmatpush1.bf16.msra.mxu0 %v1058
        %1188 = vmatprep.subr.bf16.mxu0 %v1061
        %1189 = vmatpush1.bf16.msra.mxu0 %v1060
        %1190 = vmatprep.subr.bf16.mxu0 %v1063
        %1191 = vmatpush1.bf16.msra.mxu0 %v1062
        %1192 = vmatprep.subr.bf16.mxu0 %v1065
        %1193 = vmatpush1.bf16.msra.mxu0 %v1064
        %1194 = vmatprep.subr.bf16.mxu0 %v1067
        %1195 = vmatpush1.bf16.msra.mxu0 %v1066
        %1196 = vmatprep.subr.bf16.mxu0 %v1069
        %1197 = vmatpush1.bf16.msra.mxu0 %v1068
        %1198 = vmatprep.subr.bf16.mxu0 %v1071
        %1199 = vmatpush1.bf16.msra.mxu0 %v1070
        %1200 = vmatprep.subr.bf16.mxu0 %v1073
        %1201 = vmatpush1.bf16.msra.mxu0 %v1072
        %1202 = vmatprep.subr.bf16.mxu0 %v1075
        %1203 = vmatpush1.bf16.msra.mxu0 %v1074
        %1204 = vmatprep.subr.bf16.mxu0 %v1077
        %1205 = vmatpush1.bf16.msra.mxu0 %v1076
        %1206 = vmatprep.subr.bf16.mxu0 %v1079
        %1207 = vmatpush1.bf16.msra.mxu0 %v1078
        %1208 = vmatprep.subr.bf16.mxu0 %v1081
        %1209 = vmatpush1.bf16.msra.mxu0 %v1080
        %1210 = vmatprep.mubr.bf16.mxu0 %v731
        %1211 = vmatmul.mubr.bf16.gmra.mrb[0].mxu0 %v730
        %v1212 = vpop.f32.mrb[0].mxu0
        %v1213 = vadd.f32 0.0, %v1212
        %v1214 = vpop.f32.mrb[0].mxu0
        %v1215 = vadd.f32 0.0, %v1214
        %v1216 = vpop.f32.mrb[0].mxu0
        %v1217 = vadd.f32 0.0, %v1216
        %v1218 = vpop.f32.mrb[0].mxu0
        %v1219 = vadd.f32 0.0, %v1218
        %1220 = vmatprep.mubr.bf16.mxu0 %v735
        %1221 = vmatmul.mubr.bf16.gmra.mrb[0].mxu0 %v734
        %v1222 = vpop.f32.mrb[0].mxu0
        %v1223 = vadd.f32 0.0, %v1222
        %v1224 = vpop.f32.mrb[0].mxu0
        %v1225 = vadd.f32 0.0, %v1224
        %v1226 = vpop.f32.mrb[0].mxu0
        %v1227 = vadd.f32 0.0, %v1226
        %v1228 = vpop.f32.mrb[0].mxu0
        %v1229 = vadd.f32 0.0, %v1228
        %1230 = vmatprep.mubr.bf16.mxu0 %v739
        %1231 = vmatmul.mubr.bf16.gmra.mrb[0].mxu0 %v738
        %v1232 = vpop.f32.mrb[0].mxu0
        %v1233 = vadd.f32 0.0, %v1232
        %v1234 = vpop.f32.mrb[0].mxu0
        %v1235 = vadd.f32 0.0, %v1234
        %v1236 = vpop.f32.mrb[0].mxu0
        %v1237 = vadd.f32 0.0, %v1236
        %v1238 = vpop.f32.mrb[0].mxu0
        %v1239 = vadd.f32 0.0, %v1238
        %1240 = vmatprep.mubr.bf16.mxu0 %v743
        %1241 = vmatmul.mubr.bf16.gmra.mrb[0].mxu0 %v742
        %v1242 = vpop.f32.mrb[0].mxu0
        %v1243 = vadd.f32 0.0, %v1242
        %v1244 = vpop.f32.mrb[0].mxu0
        %v1245 = vadd.f32 0.0, %v1244
        %v1246 = vpop.f32.mrb[0].mxu0
        %v1247 = vadd.f32 0.0, %v1246
        %v1248 = vpop.f32.mrb[0].mxu0
        %v1249 = vadd.f32 0.0, %v1248
        %1250 = vmatprep.mubr.bf16.mxu0 %v747
        %1251 = vmatmul.mubr.bf16.gmra.mrb[0].mxu0 %v746
        %v1252 = vpop.f32.mrb[0].mxu0
        %v1253 = vadd.f32 0.0, %v1252
        %v1254 = vpop.f32.mrb[0].mxu0
        %v1255 = vadd.f32 0.0, %v1254
        %v1256 = vpop.f32.mrb[0].mxu0
        %v1257 = vadd.f32 0.0, %v1256
        %v1258 = vpop.f32.mrb[0].mxu0
        %v1259 = vadd.f32 0.0, %v1258
        %1260 = vmatprep.mubr.bf16.mxu0 %v751
        %1261 = vmatmul.mubr.bf16.gmra.mrb[0].mxu0 %v750
        %v1262 = vpop.f32.mrb[0].mxu0
        %v1263 = vadd.f32 0.0, %v1262
        %v1264 = vpop.f32.mrb[0].mxu0
        %v1265 = vadd.f32 0.0, %v1264
        %v1266 = vpop.f32.mrb[0].mxu0
        %v1267 = vadd.f32 0.0, %v1266
        %v1268 = vpop.f32.mrb[0].mxu0
        %v1269 = vadd.f32 0.0, %v1268
        %1270 = vmatprep.mubr.bf16.mxu0 %v755
        %1271 = vmatmul.mubr.bf16.gmra.mrb[0].mxu0 %v754
        %v1272 = vpop.f32.mrb[0].mxu0
        %v1273 = vadd.f32 0.0, %v1272
        %v1274 = vpop.f32.mrb[0].mxu0
        %v1275 = vadd.f32 0.0, %v1274
        %v1276 = vpop.f32.mrb[0].mxu0
        %v1277 = vadd.f32 0.0, %v1276
        %v1278 = vpop.f32.mrb[0].mxu0
        %v1279 = vadd.f32 0.0, %v1278
        %1280 = vmatprep.mubr.bf16.mxu0 %v759
        %1281 = vmatmul.mubr.bf16.gmra.mrb[0].mxu0 %v758
        %v1282 = vpop.f32.mrb[0].mxu0
        %v1283 = vadd.f32 0.0, %v1282
        %v1284 = vpop.f32.mrb[0].mxu0
        %v1285 = vadd.f32 0.0, %v1284
        %v1286 = vpop.f32.mrb[0].mxu0
        %v1287 = vadd.f32 0.0, %v1286
        %v1288 = vpop.f32.mrb[0].mxu0
        %v1289 = vadd.f32 0.0, %v1288
        %1290 = vmatprep.mubr.bf16.mxu0 %v763
        %1291 = vmatmul.mubr.bf16.gmra.mrb[0].mxu0 %v762
        %v1292 = vpop.f32.mrb[0].mxu0
        %v1293 = vadd.f32 0.0, %v1292
        %v1294 = vpop.f32.mrb[0].mxu0
        %v1295 = vadd.f32 0.0, %v1294
        %v1296 = vpop.f32.mrb[0].mxu0
        %v1297 = vadd.f32 0.0, %v1296
        %v1298 = vpop.f32.mrb[0].mxu0
        %v1299 = vadd.f32 0.0, %v1298
        %1300 = vmatprep.mubr.bf16.mxu0 %v767
        %1301 = vmatmul.mubr.bf16.gmra.mrb[0].mxu0 %v766
        %v1302 = vpop.f32.mrb[0].mxu0
        %v1303 = vadd.f32 0.0, %v1302
        %v1304 = vpop.f32.mrb[0].mxu0
        %v1305 = vadd.f32 0.0, %v1304
        %v1306 = vpop.f32.mrb[0].mxu0
        %v1307 = vadd.f32 0.0, %v1306
        %v1308 = vpop.f32.mrb[0].mxu0
        %v1309 = vadd.f32 0.0, %v1308
        %1310 = vmatprep.mubr.bf16.mxu0 %v771
        %1311 = vmatmul.mubr.bf16.gmra.mrb[0].mxu0 %v770
        %v1312 = vpop.f32.mrb[0].mxu0
        %v1313 = vadd.f32 0.0, %v1312
        %v1314 = vpop.f32.mrb[0].mxu0
        %v1315 = vadd.f32 0.0, %v1314
        %v1316 = vpop.f32.mrb[0].mxu0
        %v1317 = vadd.f32 0.0, %v1316
        %v1318 = vpop.f32.mrb[0].mxu0
        %v1319 = vadd.f32 0.0, %v1318
        %1320 = vmatprep.mubr.bf16.mxu0 %v775
        %1321 = vmatmul.mubr.bf16.gmra.mrb[0].mxu0 %v774
        %v1322 = vpop.f32.mrb[0].mxu0
        %v1323 = vadd.f32 0.0, %v1322
        %v1324 = vpop.f32.mrb[0].mxu0
        %v1325 = vadd.f32 0.0, %v1324
        %v1326 = vpop.f32.mrb[0].mxu0
        %v1327 = vadd.f32 0.0, %v1326
        %v1328 = vpop.f32.mrb[0].mxu0
        %v1329 = vadd.f32 0.0, %v1328
        %1330 = vmatprep.mubr.bf16.mxu0 %v779
        %1331 = vmatmul.mubr.bf16.gmra.mrb[0].mxu0 %v778
        %v1332 = vpop.f32.mrb[0].mxu0
        %v1333 = vadd.f32 0.0, %v1332
        %v1334 = vpop.f32.mrb[0].mxu0
        %v1335 = vadd.f32 0.0, %v1334
        %v1336 = vpop.f32.mrb[0].mxu0
        %v1337 = vadd.f32 0.0, %v1336
        %v1338 = vpop.f32.mrb[0].mxu0
        %v1339 = vadd.f32 0.0, %v1338
        %1340 = vmatprep.mubr.bf16.mxu0 %v783
        %1341 = vmatmul.mubr.bf16.gmra.mrb[0].mxu0 %v782
        %v1342 = vpop.f32.mrb[0].mxu0
        %v1343 = vadd.f32 0.0, %v1342
        %v1344 = vpop.f32.mrb[0].mxu0
        %v1345 = vadd.f32 0.0, %v1344
        %v1346 = vpop.f32.mrb[0].mxu0
        %v1347 = vadd.f32 0.0, %v1346
        %v1348 = vpop.f32.mrb[0].mxu0
        %v1349 = vadd.f32 0.0, %v1348
        %1350 = vmatprep.mubr.bf16.mxu0 %v787
        %1351 = vmatmul.mubr.bf16.gmra.mrb[0].mxu0 %v786
        %v1352 = vpop.f32.mrb[0].mxu0
        %v1353 = vadd.f32 0.0, %v1352
        %v1354 = vpop.f32.mrb[0].mxu0
        %v1355 = vadd.f32 0.0, %v1354
        %v1356 = vpop.f32.mrb[0].mxu0
        %v1357 = vadd.f32 0.0, %v1356
        %v1358 = vpop.f32.mrb[0].mxu0
        %v1359 = vadd.f32 0.0, %v1358
        %1360 = vmatprep.mubr.bf16.mxu0 %v791
        %1361 = vmatmul.mubr.bf16.gmra.mrb[0].mxu0 %v790
        %v1362 = vpop.f32.mrb[0].mxu0
        %v1363 = vadd.f32 0.0, %v1362
        %v1364 = vpop.f32.mrb[0].mxu0
        %v1365 = vadd.f32 0.0, %v1364
        %v1366 = vpop.f32.mrb[0].mxu0
        %v1367 = vadd.f32 0.0, %v1366
        %v1368 = vpop.f32.mrb[0].mxu0
        %v1369 = vadd.f32 0.0, %v1368
        %1370 = vdwg.mxu0
        %1371 = vmatprep.subr.bf16.mxu0 %v1083
        %1372 = vmatpush1.bf16.msra.mxu0 %v1082
        %1373 = vmatprep.subr.bf16.mxu0 %v1085
        %1374 = vmatpush1.bf16.msra.mxu0 %v1084
        %1375 = vmatprep.subr.bf16.mxu0 %v1087
        %1376 = vmatpush1.bf16.msra.mxu0 %v1086
        %1377 = vmatprep.subr.bf16.mxu0 %v1089
        %1378 = vmatpush1.bf16.msra.mxu0 %v1088
        %1379 = vmatprep.subr.bf16.mxu0 %v1091
        %1380 = vmatpush1.bf16.msra.mxu0 %v1090
        %1381 = vmatprep.subr.bf16.mxu0 %v1093
        %1382 = vmatpush1.bf16.msra.mxu0 %v1092
        %1383 = vmatprep.subr.bf16.mxu0 %v1095
        %1384 = vmatpush1.bf16.msra.mxu0 %v1094
        %1385 = vmatprep.subr.bf16.mxu0 %v1097
        %1386 = vmatpush1.bf16.msra.mxu0 %v1096
        %1387 = vmatprep.subr.bf16.mxu0 %v1099
        %1388 = vmatpush1.bf16.msra.mxu0 %v1098
        %1389 = vmatprep.subr.bf16.mxu0 %v1101
        %1390 = vmatpush1.bf16.msra.mxu0 %v1100
        %1391 = vmatprep.subr.bf16.mxu0 %v1103
        %1392 = vmatpush1.bf16.msra.mxu0 %v1102
        %1393 = vmatprep.subr.bf16.mxu0 %v1105
        %1394 = vmatpush1.bf16.msra.mxu0 %v1104
        %1395 = vmatprep.subr.bf16.mxu0 %v1107
        %1396 = vmatpush1.bf16.msra.mxu0 %v1106
        %1397 = vmatprep.subr.bf16.mxu0 %v1109
        %1398 = vmatpush1.bf16.msra.mxu0 %v1108
        %1399 = vmatprep.subr.bf16.mxu0 %v1111
        %1400 = vmatpush1.bf16.msra.mxu0 %v1110
        %1401 = vmatprep.subr.bf16.mxu0 %v1113
        %1402 = vmatpush1.bf16.msra.mxu0 %v1112
        %1403 = vmatprep.mubr.bf16.mxu0 %v733
        %1404 = vmatmul.mubr.bf16.gmra.mrb[0].mxu0 %v732
        %v1405 = vpop.f32.mrb[0].mxu0
        %v1406 = vadd.f32 %v1213, %v1405
        %v1407 = vpop.f32.mrb[0].mxu0
        %v1408 = vadd.f32 %v1215, %v1407
        %v1409 = vpop.f32.mrb[0].mxu0
        %v1410 = vadd.f32 %v1217, %v1409
        %v1411 = vpop.f32.mrb[0].mxu0
        %v1412 = vadd.f32 %v1219, %v1411
        %1413 = vmatprep.mubr.bf16.mxu0 %v737
        %1414 = vmatmul.mubr.bf16.gmra.mrb[0].mxu0 %v736
        %v1415 = vpop.f32.mrb[0].mxu0
        %v1416 = vadd.f32 %v1223, %v1415
        %v1417 = vpop.f32.mrb[0].mxu0
        %v1418 = vadd.f32 %v1225, %v1417
        %v1419 = vpop.f32.mrb[0].mxu0
        %v1420 = vadd.f32 %v1227, %v1419
        %v1421 = vpop.f32.mrb[0].mxu0
        %v1422 = vadd.f32 %v1229, %v1421
        %1423 = vmatprep.mubr.bf16.mxu0 %v741
        %1424 = vmatmul.mubr.bf16.gmra.mrb[0].mxu0 %v740
        %v1425 = vpop.f32.mrb[0].mxu0
        %v1426 = vadd.f32 %v1233, %v1425
        %v1427 = vpop.f32.mrb[0].mxu0
        %v1428 = vadd.f32 %v1235, %v1427
        %v1429 = vpop.f32.mrb[0].mxu0
        %v1430 = vadd.f32 %v1237, %v1429
        %v1431 = vpop.f32.mrb[0].mxu0
        %v1432 = vadd.f32 %v1239, %v1431
        %1433 = vmatprep.mubr.bf16.mxu0 %v745
        %1434 = vmatmul.mubr.bf16.gmra.mrb[0].mxu0 %v744
        %v1435 = vpop.f32.mrb[0].mxu0
        %v1436 = vadd.f32 %v1243, %v1435
        %v1437 = vpop.f32.mrb[0].mxu0
        %v1438 = vadd.f32 %v1245, %v1437
        %v1439 = vpop.f32.mrb[0].mxu0
        %v1440 = vadd.f32 %v1247, %v1439
        %v1441 = vpop.f32.mrb[0].mxu0
        %v1442 = vadd.f32 %v1249, %v1441
        %1443 = vmatprep.mubr.bf16.mxu0 %v749
        %1444 = vmatmul.mubr.bf16.gmra.mrb[0].mxu0 %v748
        %v1445 = vpop.f32.mrb[0].mxu0
        %v1446 = vadd.f32 %v1253, %v1445
        %v1447 = vpop.f32.mrb[0].mxu0
        %v1448 = vadd.f32 %v1255, %v1447
        %v1449 = vpop.f32.mrb[0].mxu0
        %v1450 = vadd.f32 %v1257, %v1449
        %v1451 = vpop.f32.mrb[0].mxu0
        %v1452 = vadd.f32 %v1259, %v1451
        %1453 = vmatprep.mubr.bf16.mxu0 %v753
        %1454 = vmatmul.mubr.bf16.gmra.mrb[0].mxu0 %v752
        %v1455 = vpop.f32.mrb[0].mxu0
        %v1456 = vadd.f32 %v1263, %v1455
        %v1457 = vpop.f32.mrb[0].mxu0
        %v1458 = vadd.f32 %v1265, %v1457
        %v1459 = vpop.f32.mrb[0].mxu0
        %v1460 = vadd.f32 %v1267, %v1459
        %v1461 = vpop.f32.mrb[0].mxu0
        %v1462 = vadd.f32 %v1269, %v1461
        %1463 = vmatprep.mubr.bf16.mxu0 %v757
        %1464 = vmatmul.mubr.bf16.gmra.mrb[0].mxu0 %v756
        %v1465 = vpop.f32.mrb[0].mxu0
        %v1466 = vadd.f32 %v1273, %v1465
        %v1467 = vpop.f32.mrb[0].mxu0
        %v1468 = vadd.f32 %v1275, %v1467
        %v1469 = vpop.f32.mrb[0].mxu0
        %v1470 = vadd.f32 %v1277, %v1469
        %v1471 = vpop.f32.mrb[0].mxu0
        %v1472 = vadd.f32 %v1279, %v1471
        %1473 = vmatprep.mubr.bf16.mxu0 %v761
        %1474 = vmatmul.mubr.bf16.gmra.mrb[0].mxu0 %v760
        %v1475 = vpop.f32.mrb[0].mxu0
        %v1476 = vadd.f32 %v1283, %v1475
        %v1477 = vpop.f32.mrb[0].mxu0
        %v1478 = vadd.f32 %v1285, %v1477
        %v1479 = vpop.f32.mrb[0].mxu0
        %v1480 = vadd.f32 %v1287, %v1479
        %v1481 = vpop.f32.mrb[0].mxu0
        %v1482 = vadd.f32 %v1289, %v1481
        %1483 = vmatprep.mubr.bf16.mxu0 %v765
        %1484 = vmatmul.mubr.bf16.gmra.mrb[0].mxu0 %v764
        %v1485 = vpop.f32.mrb[0].mxu0
        %v1486 = vadd.f32 %v1293, %v1485
        %v1487 = vpop.f32.mrb[0].mxu0
        %v1488 = vadd.f32 %v1295, %v1487
        %v1489 = vpop.f32.mrb[0].mxu0
        %v1490 = vadd.f32 %v1297, %v1489
        %v1491 = vpop.f32.mrb[0].mxu0
        %v1492 = vadd.f32 %v1299, %v1491
        %1493 = vmatprep.mubr.bf16.mxu0 %v769
        %1494 = vmatmul.mubr.bf16.gmra.mrb[0].mxu0 %v768
        %v1495 = vpop.f32.mrb[0].mxu0
        %v1496 = vadd.f32 %v1303, %v1495
        %v1497 = vpop.f32.mrb[0].mxu0
        %v1498 = vadd.f32 %v1305, %v1497
        %v1499 = vpop.f32.mrb[0].mxu0
        %v1500 = vadd.f32 %v1307, %v1499
        %v1501 = vpop.f32.mrb[0].mxu0
        %v1502 = vadd.f32 %v1309, %v1501
        %1503 = vmatprep.mubr.bf16.mxu0 %v773
        %1504 = vmatmul.mubr.bf16.gmra.mrb[0].mxu0 %v772
        %v1505 = vpop.f32.mrb[0].mxu0
        %v1506 = vadd.f32 %v1313, %v1505
        %v1507 = vpop.f32.mrb[0].mxu0
        %v1508 = vadd.f32 %v1315, %v1507
        %v1509 = vpop.f32.mrb[0].mxu0
        %v1510 = vadd.f32 %v1317, %v1509
        %v1511 = vpop.f32.mrb[0].mxu0
        %v1512 = vadd.f32 %v1319, %v1511
        %1513 = vmatprep.mubr.bf16.mxu0 %v777
        %1514 = vmatmul.mubr.bf16.gmra.mrb[0].mxu0 %v776
        %v1515 = vpop.f32.mrb[0].mxu0
        %v1516 = vadd.f32 %v1323, %v1515
        %v1517 = vpop.f32.mrb[0].mxu0
        %v1518 = vadd.f32 %v1325, %v1517
        %v1519 = vpop.f32.mrb[0].mxu0
        %v1520 = vadd.f32 %v1327, %v1519
        %v1521 = vpop.f32.mrb[0].mxu0
        %v1522 = vadd.f32 %v1329, %v1521
        %1523 = vmatprep.mubr.bf16.mxu0 %v781
        %1524 = vmatmul.mubr.bf16.gmra.mrb[0].mxu0 %v780
        %v1525 = vpop.f32.mrb[0].mxu0
        %v1526 = vadd.f32 %v1333, %v1525
        %v1527 = vpop.f32.mrb[0].mxu0
        %v1528 = vadd.f32 %v1335, %v1527
        %v1529 = vpop.f32.mrb[0].mxu0
        %v1530 = vadd.f32 %v1337, %v1529
        %v1531 = vpop.f32.mrb[0].mxu0
        %v1532 = vadd.f32 %v1339, %v1531
        %1533 = vmatprep.mubr.bf16.mxu0 %v785
        %1534 = vmatmul.mubr.bf16.gmra.mrb[0].mxu0 %v784
        %v1535 = vpop.f32.mrb[0].mxu0
        %v1536 = vadd.f32 %v1343, %v1535
        %v1537 = vpop.f32.mrb[0].mxu0
        %v1538 = vadd.f32 %v1345, %v1537
        %v1539 = vpop.f32.mrb[0].mxu0
        %v1540 = vadd.f32 %v1347, %v1539
        %v1541 = vpop.f32.mrb[0].mxu0
        %v1542 = vadd.f32 %v1349, %v1541
        %1543 = vmatprep.mubr.bf16.mxu0 %v789
        %1544 = vmatmul.mubr.bf16.gmra.mrb[0].mxu0 %v788
        %v1545 = vpop.f32.mrb[0].mxu0
        %v1546 = vadd.f32 %v1353, %v1545
        %v1547 = vpop.f32.mrb[0].mxu0
        %v1548 = vadd.f32 %v1355, %v1547
        %v1549 = vpop.f32.mrb[0].mxu0
        %v1550 = vadd.f32 %v1357, %v1549
        %v1551 = vpop.f32.mrb[0].mxu0
        %v1552 = vadd.f32 %v1359, %v1551
        %1553 = vmatprep.mubr.bf16.mxu0 %v793
        %1554 = vmatmul.mubr.bf16.gmra.mrb[0].mxu0 %v792
        %v1555 = vpop.f32.mrb[0].mxu0
        %v1556 = vadd.f32 %v1363, %v1555
        %v1557 = vpop.f32.mrb[0].mxu0
        %v1558 = vadd.f32 %v1365, %v1557
        %v1559 = vpop.f32.mrb[0].mxu0
        %v1560 = vadd.f32 %v1367, %v1559
        %v1561 = vpop.f32.mrb[0].mxu0
        %v1562 = vadd.f32 %v1369, %v1561
        %1563 = vdwg.mxu0
        %v1564 = vadd.f32 %v346, %v1406
        %v1565 = vadd.f32 %v347, %v1408
        %v1566 = vadd.f32 %v348, %v1410
        %v1567 = vadd.f32 %v349, %v1412
        %v1568 = vadd.f32 %v350, %v1416
        %v1569 = vadd.f32 %v351, %v1418
        %v1570 = vadd.f32 %v352, %v1420
        %v1571 = vadd.f32 %v353, %v1422
        %v1572 = vadd.f32 %v354, %v1426
        %v1573 = vadd.f32 %v355, %v1428
        %v1574 = vadd.f32 %v356, %v1430
        %v1575 = vadd.f32 %v357, %v1432
        %v1576 = vadd.f32 %v358, %v1436
        %v1577 = vadd.f32 %v359, %v1438
        %v1578 = vadd.f32 %v360, %v1440
        %v1579 = vadd.f32 %v361, %v1442
        %v1580 = vadd.f32 %v362, %v1446
        %v1581 = vadd.f32 %v363, %v1448
        %v1582 = vadd.f32 %v364, %v1450
        %v1583 = vadd.f32 %v365, %v1452
        %v1584 = vadd.f32 %v366, %v1456
        %v1585 = vadd.f32 %v367, %v1458
        %v1586 = vadd.f32 %v368, %v1460
        %v1587 = vadd.f32 %v369, %v1462
        %v1588 = vadd.f32 %v370, %v1466
        %v1589 = vadd.f32 %v371, %v1468
        %v1590 = vadd.f32 %v372, %v1470
        %v1591 = vadd.f32 %v373, %v1472
        %v1592 = vadd.f32 %v374, %v1476
        %v1593 = vadd.f32 %v375, %v1478
        %v1594 = vadd.f32 %v376, %v1480
        %v1595 = vadd.f32 %v377, %v1482
        %v1596 = vadd.f32 %v378, %v1486
        %v1597 = vadd.f32 %v379, %v1488
        %v1598 = vadd.f32 %v380, %v1490
        %v1599 = vadd.f32 %v381, %v1492
        %v1600 = vadd.f32 %v382, %v1496
        %v1601 = vadd.f32 %v383, %v1498
        %v1602 = vadd.f32 %v384, %v1500
        %v1603 = vadd.f32 %v385, %v1502
        %v1604 = vadd.f32 %v386, %v1506
        %v1605 = vadd.f32 %v387, %v1508
        %v1606 = vadd.f32 %v388, %v1510
        %v1607 = vadd.f32 %v389, %v1512
        %v1608 = vadd.f32 %v390, %v1516
        %v1609 = vadd.f32 %v391, %v1518
        %v1610 = vadd.f32 %v392, %v1520
        %v1611 = vadd.f32 %v393, %v1522
        %v1612 = vadd.f32 %v394, %v1526
        %v1613 = vadd.f32 %v395, %v1528
        %v1614 = vadd.f32 %v396, %v1530
        %v1615 = vadd.f32 %v397, %v1532
        %v1616 = vadd.f32 %v398, %v1536
        %v1617 = vadd.f32 %v399, %v1538
        %v1618 = vadd.f32 %v400, %v1540
        %v1619 = vadd.f32 %v401, %v1542
        %v1620 = vadd.f32 %v402, %v1546
        %v1621 = vadd.f32 %v403, %v1548
        %v1622 = vadd.f32 %v404, %v1550
        %v1623 = vadd.f32 %v405, %v1552
        %v1624 = vadd.f32 %v406, %v1556
        %v1625 = vadd.f32 %v407, %v1558
        %v1626 = vadd.f32 %v408, %v1560
        %v1627 = vadd.f32 %v409, %v1562
        %1628 = vst [vmem:[#allocation2] sm:$0xff] %v1564
        %1629 = vst [vmem:[#allocation2 + $0x8] sm:$0xff] %v1565
        %1630 = vst [vmem:[#allocation2 + $0x10] sm:$0xff] %v1566
        %1631 = vst [vmem:[#allocation2 + $0x18] sm:$0xff] %v1567
        %1632 = vst [vmem:[#allocation2 + $0x20] sm:$0xff] %v1568
        %1633 = vst [vmem:[#allocation2 + $0x28] sm:$0xff] %v1569
        %1634 = vst [vmem:[#allocation2 + $0x30] sm:$0xff] %v1570
        %1635 = vst [vmem:[#allocation2 + $0x38] sm:$0xff] %v1571
        %1636 = vst [vmem:[#allocation2 + $0x40] sm:$0xff] %v1572
        %1637 = vst [vmem:[#allocation2 + $0x48] sm:$0xff] %v1573
        %1638 = vst [vmem:[#allocation2 + $0x50] sm:$0xff] %v1574
        %1639 = vst [vmem:[#allocation2 + $0x58] sm:$0xff] %v1575
        %1640 = vst [vmem:[#allocation2 + $0x60] sm:$0xff] %v1576
        %1641 = vst [vmem:[#allocation2 + $0x68] sm:$0xff] %v1577
        %1642 = vst [vmem:[#allocation2 + $0x70] sm:$0xff] %v1578
        %1643 = vst [vmem:[#allocation2 + $0x78] sm:$0xff] %v1579
        %1644 = vst [vmem:[#allocation2 + $0x80] sm:$0xff] %v1580
        %1645 = vst [vmem:[#allocation2 + $0x88] sm:$0xff] %v1581
        %1646 = vst [vmem:[#allocation2 + $0x90] sm:$0xff] %v1582
        %1647 = vst [vmem:[#allocation2 + $0x98] sm:$0xff] %v1583
        %1648 = vst [vmem:[#allocation2 + $0xa0] sm:$0xff] %v1584
        %1649 = vst [vmem:[#allocation2 + $0xa8] sm:$0xff] %v1585
        %1650 = vst [vmem:[#allocation2 + $0xb0] sm:$0xff] %v1586
        %1651 = vst [vmem:[#allocation2 + $0xb8] sm:$0xff] %v1587
        %1652 = vst [vmem:[#allocation2 + $0xc0] sm:$0xff] %v1588
        %1653 = vst [vmem:[#allocation2 + $0xc8] sm:$0xff] %v1589
        %1654 = vst [vmem:[#allocation2 + $0xd0] sm:$0xff] %v1590
        %1655 = vst [vmem:[#allocation2 + $0xd8] sm:$0xff] %v1591
        %1656 = vst [vmem:[#allocation2 + $0xe0] sm:$0xff] %v1592
        %1657 = vst [vmem:[#allocation2 + $0xe8] sm:$0xff] %v1593
        %1658 = vst [vmem:[#allocation2 + $0xf0] sm:$0xff] %v1594
        %1659 = vst [vmem:[#allocation2 + $0xf8] sm:$0xff] %v1595
        %1660 = vst [vmem:[#allocation2 + $0x100] sm:$0xff] %v1596
        %1661 = vst [vmem:[#allocation2 + $0x108] sm:$0xff] %v1597
        %1662 = vst [vmem:[#allocation2 + $0x110] sm:$0xff] %v1598
        %1663 = vst [vmem:[#allocation2 + $0x118] sm:$0xff] %v1599
        %1664 = vst [vmem:[#allocation2 + $0x120] sm:$0xff] %v1600
        %1665 = vst [vmem:[#allocation2 + $0x128] sm:$0xff] %v1601
        %1666 = vst [vmem:[#allocation2 + $0x130] sm:$0xff] %v1602
        %1667 = vst [vmem:[#allocation2 + $0x138] sm:$0xff] %v1603
        %1668 = vst [vmem:[#allocation2 + $0x140] sm:$0xff] %v1604
        %1669 = vst [vmem:[#allocation2 + $0x148] sm:$0xff] %v1605
        %1670 = vst [vmem:[#allocation2 + $0x150] sm:$0xff] %v1606
        %1671 = vst [vmem:[#allocation2 + $0x158] sm:$0xff] %v1607
        %1672 = vst [vmem:[#allocation2 + $0x160] sm:$0xff] %v1608
        %1673 = vst [vmem:[#allocation2 + $0x168] sm:$0xff] %v1609
        %1674 = vst [vmem:[#allocation2 + $0x170] sm:$0xff] %v1610
        %1675 = vst [vmem:[#allocation2 + $0x178] sm:$0xff] %v1611
        %1676 = vst [vmem:[#allocation2 + $0x180] sm:$0xff] %v1612
        %1677 = vst [vmem:[#allocation2 + $0x188] sm:$0xff] %v1613
        %1678 = vst [vmem:[#allocation2 + $0x190] sm:$0xff] %v1614
        %1679 = vst [vmem:[#allocation2 + $0x198] sm:$0xff] %v1615
        %1680 = vst [vmem:[#allocation2 + $0x1a0] sm:$0xff] %v1616
        %1681 = vst [vmem:[#allocation2 + $0x1a8] sm:$0xff] %v1617
        %1682 = vst [vmem:[#allocation2 + $0x1b0] sm:$0xff] %v1618
        %1683 = vst [vmem:[#allocation2 + $0x1b8] sm:$0xff] %v1619
        %1684 = vst [vmem:[#allocation2 + $0x1c0] sm:$0xff] %v1620
        %1685 = vst [vmem:[#allocation2 + $0x1c8] sm:$0xff] %v1621
        %1686 = vst [vmem:[#allocation2 + $0x1d0] sm:$0xff] %v1622
        %1687 = vst [vmem:[#allocation2 + $0x1d8] sm:$0xff] %v1623
        %1688 = vst [vmem:[#allocation2 + $0x1e0] sm:$0xff] %v1624
        %1689 = vst [vmem:[#allocation2 + $0x1e8] sm:$0xff] %v1625
        %1690 = vst [vmem:[#allocation2 + $0x1f0] sm:$0xff] %v1626
        %1691 = vst [vmem:[#allocation2 + $0x1f8] sm:$0xff] %v1627
        %p1692 = scmp.eq.s32.totalorder %s28, 3
        // Predicated region
        $region45: #{tpu_custom_call.1} parent=31 // pred_check
          %p1693 = pneg %p1692
        $region46: #{tpu_custom_call.1} parent=31 // pred_check_branch
          %1695 = sbr.rel (%p1693) target = $region48
        $region47: #{tpu_custom_call.1} parent=31 // pred_region
          %v1696 = vld [vmem:[#allocation2] sm:$0xff]
          %v1697 = vld [vmem:[#allocation2 + $0x8] sm:$0xff]
          %v1698 = vld [vmem:[#allocation2 + $0x10] sm:$0xff]
          %v1699 = vld [vmem:[#allocation2 + $0x18] sm:$0xff]
          %v1700 = vld [vmem:[#allocation2 + $0x20] sm:$0xff]
          %v1701 = vld [vmem:[#allocation2 + $0x28] sm:$0xff]
          %v1702 = vld [vmem:[#allocation2 + $0x30] sm:$0xff]
          %v1703 = vld [vmem:[#allocation2 + $0x38] sm:$0xff]
          %v1704 = vld [vmem:[#allocation2 + $0x40] sm:$0xff]
          %v1705 = vld [vmem:[#allocation2 + $0x48] sm:$0xff]
          %v1706 = vld [vmem:[#allocation2 + $0x50] sm:$0xff]
          %v1707 = vld [vmem:[#allocation2 + $0x58] sm:$0xff]
          %v1708 = vld [vmem:[#allocation2 + $0x60] sm:$0xff]
          %v1709 = vld [vmem:[#allocation2 + $0x68] sm:$0xff]
          %v1710 = vld [vmem:[#allocation2 + $0x70] sm:$0xff]
          %v1711 = vld [vmem:[#allocation2 + $0x78] sm:$0xff]
          %v1712 = vld [vmem:[#allocation2 + $0x80] sm:$0xff]
          %v1713 = vld [vmem:[#allocation2 + $0x88] sm:$0xff]
          %v1714 = vld [vmem:[#allocation2 + $0x90] sm:$0xff]
          %v1715 = vld [vmem:[#allocation2 + $0x98] sm:$0xff]
          %v1716 = vld [vmem:[#allocation2 + $0xa0] sm:$0xff]
          %v1717 = vld [vmem:[#allocation2 + $0xa8] sm:$0xff]
          %v1718 = vld [vmem:[#allocation2 + $0xb0] sm:$0xff]
          %v1719 = vld [vmem:[#allocation2 + $0xb8] sm:$0xff]
          %v1720 = vld [vmem:[#allocation2 + $0xc0] sm:$0xff]
          %v1721 = vld [vmem:[#allocation2 + $0xc8] sm:$0xff]
          %v1722 = vld [vmem:[#allocation2 + $0xd0] sm:$0xff]
          %v1723 = vld [vmem:[#allocation2 + $0xd8] sm:$0xff]
          %v1724 = vld [vmem:[#allocation2 + $0xe0] sm:$0xff]
          %v1725 = vld [vmem:[#allocation2 + $0xe8] sm:$0xff]
          %v1726 = vld [vmem:[#allocation2 + $0xf0] sm:$0xff]
          %v1727 = vld [vmem:[#allocation2 + $0xf8] sm:$0xff]
          %v1728 = vld [vmem:[#allocation2 + $0x100] sm:$0xff]
          %v1729 = vld [vmem:[#allocation2 + $0x108] sm:$0xff]
          %v1730 = vld [vmem:[#allocation2 + $0x110] sm:$0xff]
          %v1731 = vld [vmem:[#allocation2 + $0x118] sm:$0xff]
          %v1732 = vld [vmem:[#allocation2 + $0x120] sm:$0xff]
          %v1733 = vld [vmem:[#allocation2 + $0x128] sm:$0xff]
          %v1734 = vld [vmem:[#allocation2 + $0x130] sm:$0xff]
          %v1735 = vld [vmem:[#allocation2 + $0x138] sm:$0xff]
          %v1736 = vld [vmem:[#allocation2 + $0x140] sm:$0xff]
          %v1737 = vld [vmem:[#allocation2 + $0x148] sm:$0xff]
          %v1738 = vld [vmem:[#allocation2 + $0x150] sm:$0xff]
          %v1739 = vld [vmem:[#allocation2 + $0x158] sm:$0xff]
          %v1740 = vld [vmem:[#allocation2 + $0x160] sm:$0xff]
          %v1741 = vld [vmem:[#allocation2 + $0x168] sm:$0xff]
          %v1742 = vld [vmem:[#allocation2 + $0x170] sm:$0xff]
          %v1743 = vld [vmem:[#allocation2 + $0x178] sm:$0xff]
          %v1744 = vld [vmem:[#allocation2 + $0x180] sm:$0xff]
          %v1745 = vld [vmem:[#allocation2 + $0x188] sm:$0xff]
          %v1746 = vld [vmem:[#allocation2 + $0x190] sm:$0xff]
          %v1747 = vld [vmem:[#allocation2 + $0x198] sm:$0xff]
          %v1748 = vld [vmem:[#allocation2 + $0x1a0] sm:$0xff]
          %v1749 = vld [vmem:[#allocation2 + $0x1a8] sm:$0xff]
          %v1750 = vld [vmem:[#allocation2 + $0x1b0] sm:$0xff]
          %v1751 = vld [vmem:[#allocation2 + $0x1b8] sm:$0xff]
          %v1752 = vld [vmem:[#allocation2 + $0x1c0] sm:$0xff]
          %v1753 = vld [vmem:[#allocation2 + $0x1c8] sm:$0xff]
          %v1754 = vld [vmem:[#allocation2 + $0x1d0] sm:$0xff]
          %v1755 = vld [vmem:[#allocation2 + $0x1d8] sm:$0xff]
          %v1756 = vld [vmem:[#allocation2 + $0x1e0] sm:$0xff]
          %v1757 = vld [vmem:[#allocation2 + $0x1e8] sm:$0xff]
          %v1758 = vld [vmem:[#allocation2 + $0x1f0] sm:$0xff]
          %v1759 = vld [vmem:[#allocation2 + $0x1f8] sm:$0xff]
          %v1760 = vld [vmem:[%s274] sm:$0x3]
          %v1762 = vlaneseq
          %v1763 = vshrl.u32 %v1762, 7
          %v1764 = vsub.s32 0, %v1763
          %v1765 = vrot.slane %v1760, %v1764
          %v1766 = vlaneseq
          %v1767 = vshrl.u32 %v1766, 7
          %v1768 = vsub.s32 1, %v1767
          %v1769 = vrot.slane %v1760, %v1768
          %v1772 = vadd.f32 %v1696, %v1765
          %v1773 = vadd.f32 %v1697, %v1769
          %v1774 = vadd.f32 %v1698, %v1765
          %v1775 = vadd.f32 %v1699, %v1769
          %v1776 = vadd.f32 %v1700, %v1765
          %v1777 = vadd.f32 %v1701, %v1769
          %v1778 = vadd.f32 %v1702, %v1765
          %v1779 = vadd.f32 %v1703, %v1769
          %v1780 = vadd.f32 %v1704, %v1765
          %v1781 = vadd.f32 %v1705, %v1769
          %v1782 = vadd.f32 %v1706, %v1765
          %v1783 = vadd.f32 %v1707, %v1769
          %v1784 = vadd.f32 %v1708, %v1765
          %v1785 = vadd.f32 %v1709, %v1769
          %v1786 = vadd.f32 %v1710, %v1765
          %v1787 = vadd.f32 %v1711, %v1769
          %v1788 = vadd.f32 %v1712, %v1765
          %v1789 = vadd.f32 %v1713, %v1769
          %v1790 = vadd.f32 %v1714, %v1765
          %v1791 = vadd.f32 %v1715, %v1769
          %v1792 = vadd.f32 %v1716, %v1765
          %v1793 = vadd.f32 %v1717, %v1769
          %v1794 = vadd.f32 %v1718, %v1765
          %v1795 = vadd.f32 %v1719, %v1769
          %v1796 = vadd.f32 %v1720, %v1765
          %v1797 = vadd.f32 %v1721, %v1769
          %v1798 = vadd.f32 %v1722, %v1765
          %v1799 = vadd.f32 %v1723, %v1769
          %v1800 = vadd.f32 %v1724, %v1765
          %v1801 = vadd.f32 %v1725, %v1769
          %v1802 = vadd.f32 %v1726, %v1765
          %v1803 = vadd.f32 %v1727, %v1769
          %v1804 = vadd.f32 %v1728, %v1765
          %v1805 = vadd.f32 %v1729, %v1769
          %v1806 = vadd.f32 %v1730, %v1765
          %v1807 = vadd.f32 %v1731, %v1769
          %v1808 = vadd.f32 %v1732, %v1765
          %v1809 = vadd.f32 %v1733, %v1769
          %v1810 = vadd.f32 %v1734, %v1765
          %v1811 = vadd.f32 %v1735, %v1769
          %v1812 = vadd.f32 %v1736, %v1765
          %v1813 = vadd.f32 %v1737, %v1769
          %v1814 = vadd.f32 %v1738, %v1765
          %v1815 = vadd.f32 %v1739, %v1769
          %v1816 = vadd.f32 %v1740, %v1765
          %v1817 = vadd.f32 %v1741, %v1769
          %v1818 = vadd.f32 %v1742, %v1765
          %v1819 = vadd.f32 %v1743, %v1769
          %v1820 = vadd.f32 %v1744, %v1765
          %v1821 = vadd.f32 %v1745, %v1769
          %v1822 = vadd.f32 %v1746, %v1765
          %v1823 = vadd.f32 %v1747, %v1769
          %v1824 = vadd.f32 %v1748, %v1765
          %v1825 = vadd.f32 %v1749, %v1769
          %v1826 = vadd.f32 %v1750, %v1765
          %v1827 = vadd.f32 %v1751, %v1769
          %v1828 = vadd.f32 %v1752, %v1765
          %v1829 = vadd.f32 %v1753, %v1769
          %v1830 = vadd.f32 %v1754, %v1765
          %v1831 = vadd.f32 %v1755, %v1769
          %v1832 = vadd.f32 %v1756, %v1765
          %v1833 = vadd.f32 %v1757, %v1769
          %v1834 = vadd.f32 %v1758, %v1765
          %v1835 = vadd.f32 %v1759, %v1769
          %vm1836 = vcmp.ge.f32.partialorder %v1772, 0.0
          %vm1837 = vcmp.ge.f32.partialorder %v1773, 0.0
          %vm1838 = vcmp.ge.f32.partialorder %v1774, 0.0
          %vm1839 = vcmp.ge.f32.partialorder %v1775, 0.0
          %vm1840 = vcmp.ge.f32.partialorder %v1776, 0.0
          %vm1841 = vcmp.ge.f32.partialorder %v1777, 0.0
          %vm1842 = vcmp.ge.f32.partialorder %v1778, 0.0
          %vm1843 = vcmp.ge.f32.partialorder %v1779, 0.0
          %vm1844 = vcmp.ge.f32.partialorder %v1780, 0.0
          %vm1845 = vcmp.ge.f32.partialorder %v1781, 0.0
          %vm1846 = vcmp.ge.f32.partialorder %v1782, 0.0
          %vm1847 = vcmp.ge.f32.partialorder %v1783, 0.0
          %vm1848 = vcmp.ge.f32.partialorder %v1784, 0.0
          %vm1849 = vcmp.ge.f32.partialorder %v1785, 0.0
          %vm1850 = vcmp.ge.f32.partialorder %v1786, 0.0
          %vm1851 = vcmp.ge.f32.partialorder %v1787, 0.0
          %vm1852 = vcmp.ge.f32.partialorder %v1788, 0.0
          %vm1853 = vcmp.ge.f32.partialorder %v1789, 0.0
          %vm1854 = vcmp.ge.f32.partialorder %v1790, 0.0
          %vm1855 = vcmp.ge.f32.partialorder %v1791, 0.0
          %vm1856 = vcmp.ge.f32.partialorder %v1792, 0.0
          %vm1857 = vcmp.ge.f32.partialorder %v1793, 0.0
          %vm1858 = vcmp.ge.f32.partialorder %v1794, 0.0
          %vm1859 = vcmp.ge.f32.partialorder %v1795, 0.0
          %vm1860 = vcmp.ge.f32.partialorder %v1796, 0.0
          %vm1861 = vcmp.ge.f32.partialorder %v1797, 0.0
          %vm1862 = vcmp.ge.f32.partialorder %v1798, 0.0
          %vm1863 = vcmp.ge.f32.partialorder %v1799, 0.0
          %vm1864 = vcmp.ge.f32.partialorder %v1800, 0.0
          %vm1865 = vcmp.ge.f32.partialorder %v1801, 0.0
          %vm1866 = vcmp.ge.f32.partialorder %v1802, 0.0
          %vm1867 = vcmp.ge.f32.partialorder %v1803, 0.0
          %vm1868 = vcmp.ge.f32.partialorder %v1804, 0.0
          %vm1869 = vcmp.ge.f32.partialorder %v1805, 0.0
          %vm1870 = vcmp.ge.f32.partialorder %v1806, 0.0
          %vm1871 = vcmp.ge.f32.partialorder %v1807, 0.0
          %vm1872 = vcmp.ge.f32.partialorder %v1808, 0.0
          %vm1873 = vcmp.ge.f32.partialorder %v1809, 0.0
          %vm1874 = vcmp.ge.f32.partialorder %v1810, 0.0
          %vm1875 = vcmp.ge.f32.partialorder %v1811, 0.0
          %vm1876 = vcmp.ge.f32.partialorder %v1812, 0.0
          %vm1877 = vcmp.ge.f32.partialorder %v1813, 0.0
          %vm1878 = vcmp.ge.f32.partialorder %v1814, 0.0
          %vm1879 = vcmp.ge.f32.partialorder %v1815, 0.0
          %vm1880 = vcmp.ge.f32.partialorder %v1816, 0.0
          %vm1881 = vcmp.ge.f32.partialorder %v1817, 0.0
          %vm1882 = vcmp.ge.f32.partialorder %v1818, 0.0
          %vm1883 = vcmp.ge.f32.partialorder %v1819, 0.0
          %vm1884 = vcmp.ge.f32.partialorder %v1820, 0.0
          %vm1885 = vcmp.ge.f32.partialorder %v1821, 0.0
          %vm1886 = vcmp.ge.f32.partialorder %v1822, 0.0
          %vm1887 = vcmp.ge.f32.partialorder %v1823, 0.0
          %vm1888 = vcmp.ge.f32.partialorder %v1824, 0.0
          %vm1889 = vcmp.ge.f32.partialorder %v1825, 0.0
          %vm1890 = vcmp.ge.f32.partialorder %v1826, 0.0
          %vm1891 = vcmp.ge.f32.partialorder %v1827, 0.0
          %vm1892 = vcmp.ge.f32.partialorder %v1828, 0.0
          %vm1893 = vcmp.ge.f32.partialorder %v1829, 0.0
          %vm1894 = vcmp.ge.f32.partialorder %v1830, 0.0
          %vm1895 = vcmp.ge.f32.partialorder %v1831, 0.0
          %vm1896 = vcmp.ge.f32.partialorder %v1832, 0.0
          %vm1897 = vcmp.ge.f32.partialorder %v1833, 0.0
          %vm1898 = vcmp.ge.f32.partialorder %v1834, 0.0
          %vm1899 = vcmp.ge.f32.partialorder %v1835, 0.0
          %v1900 = vmul.f32 %v1772, 0.01
          %v1901 = vmul.f32 %v1773, 0.01
          %v1902 = vmul.f32 %v1774, 0.01
          %v1903 = vmul.f32 %v1775, 0.01
          %v1904 = vmul.f32 %v1776, 0.01
          %v1905 = vmul.f32 %v1777, 0.01
          %v1906 = vmul.f32 %v1778, 0.01
          %v1907 = vmul.f32 %v1779, 0.01
          %v1908 = vmul.f32 %v1780, 0.01
          %v1909 = vmul.f32 %v1781, 0.01
          %v1910 = vmul.f32 %v1782, 0.01
          %v1911 = vmul.f32 %v1783, 0.01
          %v1912 = vmul.f32 %v1784, 0.01
          %v1913 = vmul.f32 %v1785, 0.01
          %v1914 = vmul.f32 %v1786, 0.01
          %v1915 = vmul.f32 %v1787, 0.01
          %v1916 = vmul.f32 %v1788, 0.01
          %v1917 = vmul.f32 %v1789, 0.01
          %v1918 = vmul.f32 %v1790, 0.01
          %v1919 = vmul.f32 %v1791, 0.01
          %v1920 = vmul.f32 %v1792, 0.01
          %v1921 = vmul.f32 %v1793, 0.01
          %v1922 = vmul.f32 %v1794, 0.01
          %v1923 = vmul.f32 %v1795, 0.01
          %v1924 = vmul.f32 %v1796, 0.01
          %v1925 = vmul.f32 %v1797, 0.01
          %v1926 = vmul.f32 %v1798, 0.01
          %v1927 = vmul.f32 %v1799, 0.01
          %v1928 = vmul.f32 %v1800, 0.01
          %v1929 = vmul.f32 %v1801, 0.01
          %v1930 = vmul.f32 %v1802, 0.01
          %v1931 = vmul.f32 %v1803, 0.01
          %v1932 = vmul.f32 %v1804, 0.01
          %v1933 = vmul.f32 %v1805, 0.01
          %v1934 = vmul.f32 %v1806, 0.01
          %v1935 = vmul.f32 %v1807, 0.01
          %v1936 = vmul.f32 %v1808, 0.01
          %v1937 = vmul.f32 %v1809, 0.01
          %v1938 = vmul.f32 %v1810, 0.01
          %v1939 = vmul.f32 %v1811, 0.01
          %v1940 = vmul.f32 %v1812, 0.01
          %v1941 = vmul.f32 %v1813, 0.01
          %v1942 = vmul.f32 %v1814, 0.01
          %v1943 = vmul.f32 %v1815, 0.01
          %v1944 = vmul.f32 %v1816, 0.01
          %v1945 = vmul.f32 %v1817, 0.01
          %v1946 = vmul.f32 %v1818, 0.01
          %v1947 = vmul.f32 %v1819, 0.01
          %v1948 = vmul.f32 %v1820, 0.01
          %v1949 = vmul.f32 %v1821, 0.01
          %v1950 = vmul.f32 %v1822, 0.01
          %v1951 = vmul.f32 %v1823, 0.01
          %v1952 = vmul.f32 %v1824, 0.01
          %v1953 = vmul.f32 %v1825, 0.01
          %v1954 = vmul.f32 %v1826, 0.01
          %v1955 = vmul.f32 %v1827, 0.01
          %v1956 = vmul.f32 %v1828, 0.01
          %v1957 = vmul.f32 %v1829, 0.01
          %v1958 = vmul.f32 %v1830, 0.01
          %v1959 = vmul.f32 %v1831, 0.01
          %v1960 = vmul.f32 %v1832, 0.01
          %v1961 = vmul.f32 %v1833, 0.01
          %v1962 = vmul.f32 %v1834, 0.01
          %v1963 = vmul.f32 %v1835, 0.01
          %v1964 = vsel %vm1836, %v1772, %v1900
          %v1965 = vsel %vm1837, %v1773, %v1901
          %v1966 = vsel %vm1838, %v1774, %v1902
          %v1967 = vsel %vm1839, %v1775, %v1903
          %v1968 = vsel %vm1840, %v1776, %v1904
          %v1969 = vsel %vm1841, %v1777, %v1905
          %v1970 = vsel %vm1842, %v1778, %v1906
          %v1971 = vsel %vm1843, %v1779, %v1907
          %v1972 = vsel %vm1844, %v1780, %v1908
          %v1973 = vsel %vm1845, %v1781, %v1909
          %v1974 = vsel %vm1846, %v1782, %v1910
          %v1975 = vsel %vm1847, %v1783, %v1911
          %v1976 = vsel %vm1848, %v1784, %v1912
          %v1977 = vsel %vm1849, %v1785, %v1913
          %v1978 = vsel %vm1850, %v1786, %v1914
          %v1979 = vsel %vm1851, %v1787, %v1915
          %v1980 = vsel %vm1852, %v1788, %v1916
          %v1981 = vsel %vm1853, %v1789, %v1917
          %v1982 = vsel %vm1854, %v1790, %v1918
          %v1983 = vsel %vm1855, %v1791, %v1919
          %v1984 = vsel %vm1856, %v1792, %v1920
          %v1985 = vsel %vm1857, %v1793, %v1921
          %v1986 = vsel %vm1858, %v1794, %v1922
          %v1987 = vsel %vm1859, %v1795, %v1923
          %v1988 = vsel %vm1860, %v1796, %v1924
          %v1989 = vsel %vm1861, %v1797, %v1925
          %v1990 = vsel %vm1862, %v1798, %v1926
          %v1991 = vsel %vm1863, %v1799, %v1927
          %v1992 = vsel %vm1864, %v1800, %v1928
          %v1993 = vsel %vm1865, %v1801, %v1929
          %v1994 = vsel %vm1866, %v1802, %v1930
          %v1995 = vsel %vm1867, %v1803, %v1931
          %v1996 = vsel %vm1868, %v1804, %v1932
          %v1997 = vsel %vm1869, %v1805, %v1933
          %v1998 = vsel %vm1870, %v1806, %v1934
          %v1999 = vsel %vm1871, %v1807, %v1935
          %v2000 = vsel %vm1872, %v1808, %v1936
          %v2001 = vsel %vm1873, %v1809, %v1937
          %v2002 = vsel %vm1874, %v1810, %v1938
          %v2003 = vsel %vm1875, %v1811, %v1939
          %v2004 = vsel %vm1876, %v1812, %v1940
          %v2005 = vsel %vm1877, %v1813, %v1941
          %v2006 = vsel %vm1878, %v1814, %v1942
          %v2007 = vsel %vm1879, %v1815, %v1943
          %v2008 = vsel %vm1880, %v1816, %v1944
          %v2009 = vsel %vm1881, %v1817, %v1945
          %v2010 = vsel %vm1882, %v1818, %v1946
          %v2011 = vsel %vm1883, %v1819, %v1947
          %v2012 = vsel %vm1884, %v1820, %v1948
          %v2013 = vsel %vm1885, %v1821, %v1949
          %v2014 = vsel %vm1886, %v1822, %v1950
          %v2015 = vsel %vm1887, %v1823, %v1951
          %v2016 = vsel %vm1888, %v1824, %v1952
          %v2017 = vsel %vm1889, %v1825, %v1953
          %v2018 = vsel %vm1890, %v1826, %v1954
          %v2019 = vsel %vm1891, %v1827, %v1955
          %v2020 = vsel %vm1892, %v1828, %v1956
          %v2021 = vsel %vm1893, %v1829, %v1957
          %v2022 = vsel %vm1894, %v1830, %v1958
          %v2023 = vsel %vm1895, %v1831, %v1959
          %v2024 = vsel %vm1896, %v1832, %v1960
          %v2025 = vsel %vm1897, %v1833, %v1961
          %v2026 = vsel %vm1898, %v1834, %v1962
          %v2027 = vsel %vm1899, %v1835, %v1963
          %v2028 = vpack.c.bf16 %v1966, %v1964
          %v2029 = vpack.c.bf16 %v1967, %v1965
          %v2030 = vpack.c.bf16 %v1970, %v1968
          %v2031 = vpack.c.bf16 %v1971, %v1969
          %v2032 = vpack.c.bf16 %v1974, %v1972
          %v2033 = vpack.c.bf16 %v1975, %v1973
          %v2034 = vpack.c.bf16 %v1978, %v1976
          %v2035 = vpack.c.bf16 %v1979, %v1977
          %v2036 = vpack.c.bf16 %v1982, %v1980
          %v2037 = vpack.c.bf16 %v1983, %v1981
          %v2038 = vpack.c.bf16 %v1986, %v1984
          %v2039 = vpack.c.bf16 %v1987, %v1985
          %v2040 = vpack.c.bf16 %v1990, %v1988
          %v2041 = vpack.c.bf16 %v1991, %v1989
          %v2042 = vpack.c.bf16 %v1994, %v1992
          %v2043 = vpack.c.bf16 %v1995, %v1993
          %v2044 = vpack.c.bf16 %v1998, %v1996
          %v2045 = vpack.c.bf16 %v1999, %v1997
          %v2046 = vpack.c.bf16 %v2002, %v2000
          %v2047 = vpack.c.bf16 %v2003, %v2001
          %v2048 = vpack.c.bf16 %v2006, %v2004
          %v2049 = vpack.c.bf16 %v2007, %v2005
          %v2050 = vpack.c.bf16 %v2010, %v2008
          %v2051 = vpack.c.bf16 %v2011, %v2009
          %v2052 = vpack.c.bf16 %v2014, %v2012
          %v2053 = vpack.c.bf16 %v2015, %v2013
          %v2054 = vpack.c.bf16 %v2018, %v2016
          %v2055 = vpack.c.bf16 %v2019, %v2017
          %v2056 = vpack.c.bf16 %v2022, %v2020
          %v2057 = vpack.c.bf16 %v2023, %v2021
          %v2058 = vpack.c.bf16 %v2026, %v2024
          %v2059 = vpack.c.bf16 %v2027, %v2025
          %v2092 = vunpack.c.l.b16 %v2028
          %v2093 = vunpack.c.l.b16 %v2029
          %v2094 = vunpack.c.h.b16 %v2028
          %v2095 = vunpack.c.h.b16 %v2029
          %v2096 = vunpack.c.l.b16 %v2030
          %v2097 = vunpack.c.l.b16 %v2031
          %v2098 = vunpack.c.h.b16 %v2030
          %v2099 = vunpack.c.h.b16 %v2031
          %v2100 = vunpack.c.l.b16 %v2032
          %v2101 = vunpack.c.l.b16 %v2033
          %v2102 = vunpack.c.h.b16 %v2032
          %v2103 = vunpack.c.h.b16 %v2033
          %v2104 = vunpack.c.l.b16 %v2034
          %v2105 = vunpack.c.l.b16 %v2035
          %v2106 = vunpack.c.h.b16 %v2034
          %v2107 = vunpack.c.h.b16 %v2035
          %v2108 = vunpack.c.l.b16 %v2036
          %v2109 = vunpack.c.l.b16 %v2037
          %v2110 = vunpack.c.h.b16 %v2036
          %v2111 = vunpack.c.h.b16 %v2037
          %v2112 = vunpack.c.l.b16 %v2038
          %v2113 = vunpack.c.l.b16 %v2039
          %v2114 = vunpack.c.h.b16 %v2038
          %v2115 = vunpack.c.h.b16 %v2039
          %v2116 = vunpack.c.l.b16 %v2040
          %v2117 = vunpack.c.l.b16 %v2041
          %v2118 = vunpack.c.h.b16 %v2040
          %v2119 = vunpack.c.h.b16 %v2041
          %v2120 = vunpack.c.l.b16 %v2042
          %v2121 = vunpack.c.l.b16 %v2043
          %v2122 = vunpack.c.h.b16 %v2042
          %v2123 = vunpack.c.h.b16 %v2043
          %v2124 = vunpack.c.l.b16 %v2044
          %v2125 = vunpack.c.l.b16 %v2045
          %v2126 = vunpack.c.h.b16 %v2044
          %v2127 = vunpack.c.h.b16 %v2045
          %v2128 = vunpack.c.l.b16 %v2046
          %v2129 = vunpack.c.l.b16 %v2047
          %v2130 = vunpack.c.h.b16 %v2046
          %v2131 = vunpack.c.h.b16 %v2047
          %v2132 = vunpack.c.l.b16 %v2048
          %v2133 = vunpack.c.l.b16 %v2049
          %v2134 = vunpack.c.h.b16 %v2048
          %v2135 = vunpack.c.h.b16 %v2049
          %v2136 = vunpack.c.l.b16 %v2050
          %v2137 = vunpack.c.l.b16 %v2051
          %v2138 = vunpack.c.h.b16 %v2050
          %v2139 = vunpack.c.h.b16 %v2051
          %v2140 = vunpack.c.l.b16 %v2052
          %v2141 = vunpack.c.l.b16 %v2053
          %v2142 = vunpack.c.h.b16 %v2052
          %v2143 = vunpack.c.h.b16 %v2053
          %v2144 = vunpack.c.l.b16 %v2054
          %v2145 = vunpack.c.l.b16 %v2055
          %v2146 = vunpack.c.h.b16 %v2054
          %v2147 = vunpack.c.h.b16 %v2055
          %v2148 = vunpack.c.l.b16 %v2056
          %v2149 = vunpack.c.l.b16 %v2057
          %v2150 = vunpack.c.h.b16 %v2056
          %v2151 = vunpack.c.h.b16 %v2057
          %v2152 = vunpack.c.l.b16 %v2058
          %v2153 = vunpack.c.l.b16 %v2059
          %v2154 = vunpack.c.h.b16 %v2058
          %v2155 = vunpack.c.h.b16 %v2059
          %v2156 = vpack.c.b16 %v2093, %v2092
          %v2157 = vpack.c.b16 %v2095, %v2094
          %v2158 = vpack.c.b16 %v2097, %v2096
          %v2159 = vpack.c.b16 %v2099, %v2098
          %v2160 = vpack.c.b16 %v2101, %v2100
          %v2161 = vpack.c.b16 %v2103, %v2102
          %v2162 = vpack.c.b16 %v2105, %v2104
          %v2163 = vpack.c.b16 %v2107, %v2106
          %v2164 = vpack.c.b16 %v2109, %v2108
          %v2165 = vpack.c.b16 %v2111, %v2110
          %v2166 = vpack.c.b16 %v2113, %v2112
          %v2167 = vpack.c.b16 %v2115, %v2114
          %v2168 = vpack.c.b16 %v2117, %v2116
          %v2169 = vpack.c.b16 %v2119, %v2118
          %v2170 = vpack.c.b16 %v2121, %v2120
          %v2171 = vpack.c.b16 %v2123, %v2122
          %v2172 = vpack.c.b16 %v2125, %v2124
          %v2173 = vpack.c.b16 %v2127, %v2126
          %v2174 = vpack.c.b16 %v2129, %v2128
          %v2175 = vpack.c.b16 %v2131, %v2130
          %v2176 = vpack.c.b16 %v2133, %v2132
          %v2177 = vpack.c.b16 %v2135, %v2134
          %v2178 = vpack.c.b16 %v2137, %v2136
          %v2179 = vpack.c.b16 %v2139, %v2138
          %v2180 = vpack.c.b16 %v2141, %v2140
          %v2181 = vpack.c.b16 %v2143, %v2142
          %v2182 = vpack.c.b16 %v2145, %v2144
          %v2183 = vpack.c.b16 %v2147, %v2146
          %v2184 = vpack.c.b16 %v2149, %v2148
          %v2185 = vpack.c.b16 %v2151, %v2150
          %v2186 = vpack.c.b16 %v2153, %v2152
          %v2187 = vpack.c.b16 %v2155, %v2154
          %2220 = vst [vmem:[#allocation8] sm:$0xff] %v2156
          %2221 = vst [vmem:[#allocation8 + $0x8] sm:$0xff] %v2157
          %2222 = vst [vmem:[#allocation8 + $0x10] sm:$0xff] %v2158
          %2223 = vst [vmem:[#allocation8 + $0x18] sm:$0xff] %v2159
          %2224 = vst [vmem:[#allocation8 + $0x20] sm:$0xff] %v2160
          %2225 = vst [vmem:[#allocation8 + $0x28] sm:$0xff] %v2161
          %2226 = vst [vmem:[#allocation8 + $0x30] sm:$0xff] %v2162
          %2227 = vst [vmem:[#allocation8 + $0x38] sm:$0xff] %v2163
          %2228 = vst [vmem:[#allocation8 + $0x40] sm:$0xff] %v2164
          %2229 = vst [vmem:[#allocation8 + $0x48] sm:$0xff] %v2165
          %2230 = vst [vmem:[#allocation8 + $0x50] sm:$0xff] %v2166
          %2231 = vst [vmem:[#allocation8 + $0x58] sm:$0xff] %v2167
          %2232 = vst [vmem:[#allocation8 + $0x60] sm:$0xff] %v2168
          %2233 = vst [vmem:[#allocation8 + $0x68] sm:$0xff] %v2169
          %2234 = vst [vmem:[#allocation8 + $0x70] sm:$0xff] %v2170
          %2235 = vst [vmem:[#allocation8 + $0x78] sm:$0xff] %v2171
          %2236 = vst [vmem:[#allocation8 + $0x80] sm:$0xff] %v2172
          %2237 = vst [vmem:[#allocation8 + $0x88] sm:$0xff] %v2173
          %2238 = vst [vmem:[#allocation8 + $0x90] sm:$0xff] %v2174
          %2239 = vst [vmem:[#allocation8 + $0x98] sm:$0xff] %v2175
          %2240 = vst [vmem:[#allocation8 + $0xa0] sm:$0xff] %v2176
          %2241 = vst [vmem:[#allocation8 + $0xa8] sm:$0xff] %v2177
          %2242 = vst [vmem:[#allocation8 + $0xb0] sm:$0xff] %v2178
          %2243 = vst [vmem:[#allocation8 + $0xb8] sm:$0xff] %v2179
          %2244 = vst [vmem:[#allocation8 + $0xc0] sm:$0xff] %v2180
          %2245 = vst [vmem:[#allocation8 + $0xc8] sm:$0xff] %v2181
          %2246 = vst [vmem:[#allocation8 + $0xd0] sm:$0xff] %v2182
          %2247 = vst [vmem:[#allocation8 + $0xd8] sm:$0xff] %v2183
          %2248 = vst [vmem:[#allocation8 + $0xe0] sm:$0xff] %v2184
          %2249 = vst [vmem:[#allocation8 + $0xe8] sm:$0xff] %v2185
          %2250 = vst [vmem:[#allocation8 + $0xf0] sm:$0xff] %v2186
          %2251 = vst [vmem:[#allocation8 + $0xf8] sm:$0xff] %v2187
        $region48: #{tpu_custom_call.1} parent=31 // pred_fallthru
          _
        // Predicated region
        $region49: #{tpu_custom_call.1} parent=31 // pred_check
          %p2252 = pneg %p142
        $region50: #{tpu_custom_call.1} parent=31 // pred_check_branch
          %2254 = sbr.rel (%p2252) target = $region52
        $region51: #{tpu_custom_call.1} parent=31 // pred_region
          %s2255 = smul.u32 32, %s26
          %s2256 = smul.u32 2, %s27
          %s2258 = ssub.s32 4096, 4096
          %2259 = vsyncadd [#allocation5], %s2258
          %s2260 = smul.addr %s2255, 2
          %s2261 = sadd.s32 %s2256, %s2260
          %s2262 = smul.addr %s2261, 64
          %s2263 = scalar_lea.hbm %s3, %s2262
          %s2264 = sshll.u32 [#allocation8], 4
          %s2265 = int_to_ptr.vmem [resolvable:$true] %s2264
          %2270 = dma.vmem_to_hbm [thread:$0]  %s2265, 4096, %s2263, [#allocation5], 128, 128, 8
        $region52: #{tpu_custom_call.1} parent=31 // pred_fallthru
          _
        // Predicated region
        $region53: #{tpu_custom_call.1} parent=31 // pred_check
          %p2271 = pneg %p142
        $region54: #{tpu_custom_call.1} parent=31 // pred_check_branch
          %2273 = sbr.rel (%p2271) target = $region56
        $region55: #{tpu_custom_call.1} parent=31 // pred_region
          %2274 = dma.done [#allocation5], 4096
        $region56: #{tpu_custom_call.1} parent=31 // pred_fallthru
          _
      $region32: #{tpu_custom_call.1} parent=5 // pred_fallthru
        _
      %p2275 = scmp.le.s32.totalorder 2, %s16
      // Predicated region
      $region57: #{tpu_custom_call.1} parent=5 // pred_check
        %p2276 = pneg %p2275
      $region58: #{tpu_custom_call.1} parent=5 // pred_check_branch
        %2278 = sbr.rel (%p2276) target = $region60
      $region59: #{tpu_custom_call.1} parent=5 // pred_region
        %s2279 = ssub.s32 %s16, 2
      $region60: #{tpu_custom_call.1} parent=5 // pred_fallthru
        _
    $region6: #{tpu_custom_call.1} parent=1 // loop_footer
      %s20 = sadd.s32 1, %s16
    $region7: #{tpu_custom_call.1} parent=1 // loop_footer_branch
      %15 = sbr.rel target = $region3
    $region8: #{tpu_custom_call.1} parent=1 // loop_exit
      _
    %2280 = vsyncpa [#allocation4], 1
    %s2281 = scalar_lea.sflag [#allocation4], 1
    %2282 = vsyncpa %s2281, 1
    %2283 = vsyncpa [#allocation7], 1
    %s2284 = scalar_lea.sflag [#allocation7], 1
    %2285 = vsyncpa %s2284, 1
    %2286 = vsyncpa [#allocation5], 1
    %s2287 = scalar_lea.sflag [#allocation5], 1
    %2288 = vsyncpa %s2287, 1

</llo_original>
